<compile_context>
chip_gen: v7x
topology: tpu7x:2x2x1
jax: 0.10.0
libtpu: 0.0.40
codegen_flags: <defaults>
</compile_context>

<pallas_src>
import functools

import jax
import jax.numpy as jnp
from jax.experimental import pallas as pl
from jax.experimental.pallas import tpu as pltpu


def _round_up(x, m):
    return (x + m - 1) // m * m


# ----------------------------------------------------------------------------
# Fused kernel.  Grid = (K tiles of the backbone GEMM,).
#   step k: feat_acc += x[:, k*tk:(k+1)*tk] @ Wb[k*tk:(k+1)*tk, :]
#   last k: feat = feat_acc + bb
#           h   = relu(feat @ W1_cat + b1_cat)        (all heads at once)
#           dis = h @ W2_blockdiag + b2_cat
#           cls = dis @ Wc_blockdiag + bc_cat
# ----------------------------------------------------------------------------
def _fused_kernel(x_ref, wb_ref, bb_ref, w1_ref, b1_ref, w2_ref, b2_ref,
                  wc_ref, bc_ref, dis_ref, cls_ref, feat_acc):
    k = pl.program_id(0)

    @pl.when(k == 0)
    def _():
        feat_acc[...] = jnp.zeros_like(feat_acc)

    # Backbone GEMM K-step: bf16 operands, f32 accumulation.
    feat_acc[...] += jnp.dot(x_ref[...], wb_ref[...],
                             preferred_element_type=jnp.float32)

    @pl.when(k == pl.num_programs(0) - 1)
    def _():
        feat = feat_acc[...] + bb_ref[...]                      # (B, dim_init) f32
        h = jnp.dot(feat.astype(w1_ref.dtype), w1_ref[...],
                    preferred_element_type=jnp.float32) + b1_ref[...]
        h = jnp.maximum(h, 0.0)                                 # ReLU in f32
        d = jnp.dot(h.astype(w2_ref.dtype), w2_ref[...],
                    preferred_element_type=jnp.float32) + b2_ref[...]
        c = jnp.dot(d.astype(wc_ref.dtype), wc_ref[...],
                    preferred_element_type=jnp.float32) + bc_ref[...]
        dis_ref[...] = d.astype(dis_ref.dtype)                  # (B, Dh_pad)
        cls_ref[...] = c.astype(cls_ref.dtype)                  # (B, A*128)


def extractor_forward(x, wb, bb, w1, b1, w2, b2, wc, bc, *, tk):
    """x: (B_pad, K_pad) bf16; weights pre-concatenated / block-diagonal."""
    bpad, kpad = x.shape
    dim_init = wb.shape[1]
    dh_pad = w1.shape[1]
    nc_pad = wc.shape[1]
    kt = kpad // tk

    dis, cls = pl.pallas_call(
        _fused_kernel,
        out_shape=(
            jax.ShapeDtypeStruct((bpad, dh_pad), jnp.float32),
            jax.ShapeDtypeStruct((bpad, nc_pad), jnp.float32),
        ),
        grid=(kt,),
        in_specs=[
            pl.BlockSpec((bpad, tk), lambda k: (0, k)),           # x K-stream
            pl.BlockSpec((tk, dim_init), lambda k: (k, 0)),       # Wb K-stream
            pl.BlockSpec((1, dim_init), lambda k: (0, 0)),        # bb (resident)
            pl.BlockSpec((dim_init, dh_pad), lambda k: (0, 0)),   # W1 concat
            pl.BlockSpec((1, dh_pad), lambda k: (0, 0)),          # b1 concat
            pl.BlockSpec((dh_pad, dh_pad), lambda k: (0, 0)),     # W2 block-diag
            pl.BlockSpec((1, dh_pad), lambda k: (0, 0)),          # b2 concat
            pl.BlockSpec((dh_pad, nc_pad), lambda k: (0, 0)),     # Wc block-diag
            pl.BlockSpec((1, nc_pad), lambda k: (0, 0)),          # bc concat
        ],
        out_specs=(
            pl.BlockSpec((bpad, dh_pad), lambda k: (0, 0)),       # dis slab
            pl.BlockSpec((bpad, nc_pad), lambda k: (0, 0)),       # cls slab
        ),
        scratch_shapes=[pltpu.VMEM((bpad, dim_init), jnp.float32)],
        compiler_params=pltpu.CompilerParams(
            dimension_semantics=("arbitrary",),                   # K is a reduction
        ),
    )(x, wb, bb, w1, b1, w2, b2, wc, bc)
    return dis, cls


# ----------------------------------------------------------------------------
# Extractor wrapper (matches the PyTorch module's forward semantics).
# ----------------------------------------------------------------------------
class Extractor:
    def __init__(self, attr_nums, dim_in, dim_init=512, dim_chunk=32, seed=0,
                 param_dtype=jnp.bfloat16):
        self.attr_nums = list(attr_nums)
        A = len(self.attr_nums)
        self.dim_chunk = dim_chunk
        self.dim_init = dim_init
        self.dim_in = dim_in
        self.n_pad = 128                              # lane-dense classifier width
        self.dh_pad = _round_up(A * dim_chunk, 128)   # lane-dense hidden width
        # K tiling for the backbone GEMM (tile divides the padded K).
        self.tk = min(512, _round_up(dim_in, 128))
        self.k_pad = _round_up(dim_in, self.tk)

        key = jax.random.PRNGKey(seed)
        ks = jax.random.split(key, 7)
        scale = 0.02

        # --- backbone stand-in: feat = x @ Wb + bb (Wb zero-padded along K) ---
        wb = scale * jax.random.normal(ks[0], (dim_in, dim_init), jnp.float32)
        wb = jnp.zeros((self.k_pad, dim_init), jnp.float32).at[:dim_in].set(wb)
        self.wb = wb.astype(param_dtype)
        self.bb = scale * jax.random.normal(ks[1], (1, dim_init), jnp.float32)

        # --- per-attribute heads packed into concatenated / block-diag GEMMs ---
        w1 = scale * jax.random.normal(ks[2], (A, dim_init, dim_chunk), jnp.float32)
        b1 = scale * jax.random.normal(ks[3], (A, dim_chunk), jnp.float32)
        w2 = scale * jax.random.normal(ks[4], (A, dim_chunk, dim_chunk), jnp.float32)
        b2 = scale * jax.random.normal(ks[5], (A, dim_chunk), jnp.float32)

        w1_cat = jnp.zeros((dim_init, self.dh_pad), jnp.float32)
        b1_cat = jnp.zeros((1, self.dh_pad), jnp.float32)
        w2_bd = jnp.zeros((self.dh_pad, self.dh_pad), jnp.float32)
        b2_cat = jnp.zeros((1, self.dh_pad), jnp.float32)
        wc_bd = jnp.zeros((self.dh_pad, A * self.n_pad), jnp.float32)
        bc_cat = jnp.zeros((1, A * self.n_pad), jnp.float32)

        wc_key, _ = jax.random.split(ks[6])
        for a, n_a in enumerate(self.attr_nums):
            lo = a * dim_chunk
            w1_cat = w1_cat.at[:, lo:lo + dim_chunk].set(w1[a])
            b1_cat = b1_cat.at[0, lo:lo + dim_chunk].set(b1[a])
            w2_bd = w2_bd.at[lo:lo + dim_chunk, lo:lo + dim_chunk].set(w2[a])
            b2_cat = b2_cat.at[0, lo:lo + dim_chunk].set(b2[a])
            kwi, kbi = jax.random.split(jax.random.fold_in(wc_key, a))
            wc_a = scale * jax.random.normal(kwi, (dim_chunk, n_a), jnp.float32)
            bc_a = scale * jax.random.normal(kbi, (n_a,), jnp.float32)
            co = a * self.n_pad
            wc_bd = wc_bd.at[lo:lo + dim_chunk, co:co + n_a].set(wc_a)
            bc_cat = bc_cat.at[0, co:co + n_a].set(bc_a)

        self.w1 = w1_cat.astype(param_dtype)
        self.b1 = b1_cat
        self.w2 = w2_bd.astype(param_dtype)
        self.b2 = b2_cat
        self.wc = wc_bd.astype(param_dtype)
        self.bc = bc_cat

    @functools.partial(jax.jit, static_argnums=0)
    def _forward(self, img):
        B = img.shape[0]
        x = img.reshape(B, -1).astype(jnp.float32)         # NCHW -> (B, C*H*W)
        # Pad batch to a sublane multiple (>=8) and K to the tile size.
        b_pad = _round_up(max(B, 8), 8)
        xp = jnp.zeros((b_pad, self.k_pad), jnp.float32)
        xp = xp.at[:B, :self.dim_in].set(x).astype(self.wb.dtype)
        return extractor_forward(xp, self.wb, self.bb, self.w1, self.b1,
                                 self.w2, self.b2, self.wc, self.bc,
                                 tk=self.tk)

    def __call__(self, img):
        B = img.shape[0]
        dis_slab, cls_slab = self._forward(img)
        dc, npad = self.dim_chunk, self.n_pad
        dis_feat = [dis_slab[:B, a * dc:(a + 1) * dc]
                    for a in range(len(self.attr_nums))]
        # .squeeze() mirrors the PyTorch module's `.squeeze()` (drops any
        # size-1 dims, including batch when B == 1 — same as torch).
        attr_classification_out = [
            jnp.squeeze(cls_slab[:B, a * npad:a * npad + n_a])
            for a, n_a in enumerate(self.attr_nums)
        ]
        return dis_feat, attr_classification_out


# ----------------------------------------------------------------------------
if __name__ == "__main__":
    B, C, H, W = 2, 4, 16, 16            # small NCHW image
    attr_nums = [4, 6, 3]
    dim_init, dim_chunk = 512, 32

    key = jax.random.PRNGKey(0)
    img = jax.random.normal(key, (B, C, H, W), jnp.float32)

    model = Extractor(attr_nums, dim_in=C * H * W,
                      dim_init=dim_init, dim_chunk=dim_chunk, seed=0)
    dis_feat, attr_out = model(img)

    jax.block_until_ready(dis_feat)
    jax.block_until_ready(attr_out)

    # sanity on shapes
    assert all(d.shape == (B, dim_chunk) for d in dis_feat)
    assert all(o.shape == (B, n) for o, n in zip(attr_out, attr_nums))
    print("KERNEL_OK")
</pallas_src>

<mosaic_0001>
module attributes {stable_mosaic.version = 11 : i64} {
  func.func @_fused_kernel(%arg0: i32, %arg1: memref<8x512xbf16, #tpu.memory_space<vmem>>, %arg2: memref<512x512xbf16, #tpu.memory_space<vmem>>, %arg3: memref<1x512xf32, #tpu.memory_space<vmem>>, %arg4: memref<512x128xbf16, #tpu.memory_space<vmem>>, %arg5: memref<1x128xf32, #tpu.memory_space<vmem>>, %arg6: memref<128x128xbf16, #tpu.memory_space<vmem>>, %arg7: memref<1x128xf32, #tpu.memory_space<vmem>>, %arg8: memref<128x384xbf16, #tpu.memory_space<vmem>>, %arg9: memref<1x384xf32, #tpu.memory_space<vmem>>, %arg10: memref<8x128xf32, #tpu.memory_space<vmem>>, %arg11: memref<8x384xf32, #tpu.memory_space<vmem>>, %arg12: memref<8x512xf32, #tpu.memory_space<vmem>>) attributes {dimension_semantics = [#tpu.dimension_semantics<arbitrary>], iteration_bounds = array<i64: 2>, scalar_prefetch = 0 : i64, scratch_operands = 1 : i64, tpu.core_type = #tpu.core_type<tc>, window_params = [{transform_indices = @transform_0, window_bounds = array<i64: 8, 512>}, {transform_indices = @transform_1, window_bounds = array<i64: 512, 512>}, {pipeline_mode = #tpu.pipeline_mode<synchronous>, transform_indices = @transform_2, window_bounds = array<i64: 1, 512>}, {pipeline_mode = #tpu.pipeline_mode<synchronous>, transform_indices = @transform_3, window_bounds = array<i64: 512, 128>}, {pipeline_mode = #tpu.pipeline_mode<synchronous>, transform_indices = @transform_4, window_bounds = array<i64: 1, 128>}, {pipeline_mode = #tpu.pipeline_mode<synchronous>, transform_indices = @transform_5, window_bounds = array<i64: 128, 128>}, {pipeline_mode = #tpu.pipeline_mode<synchronous>, transform_indices = @transform_6, window_bounds = array<i64: 1, 128>}, {pipeline_mode = #tpu.pipeline_mode<synchronous>, transform_indices = @transform_7, window_bounds = array<i64: 128, 384>}, {pipeline_mode = #tpu.pipeline_mode<synchronous>, transform_indices = @transform_8, window_bounds = array<i64: 1, 384>}, {pipeline_mode = #tpu.pipeline_mode<synchronous>, transform_indices = @transform_9, window_bounds = array<i64: 8, 128>}, {pipeline_mode = #tpu.pipeline_mode<synchronous>, transform_indices = @transform_10, window_bounds = array<i64: 8, 384>}]} {
    %c0_i32 = arith.constant 0 : i32
    %0 = arith.cmpi eq, %arg0, %c0_i32 : i32
    %1 = arith.extui %0 : i1 to i32
    %c0_i32_0 = arith.constant 0 : i32
    %2 = arith.cmpi ne, %1, %c0_i32_0 : i32
    scf.if %2 {
      %cst_9 = arith.constant 0.000000e+00 : f32
      %12 = vector.broadcast %cst_9 : f32 to vector<8x512xf32>
      %c0_10 = arith.constant 0 : index
      %c0_11 = arith.constant 0 : index
      %13 = vector.load %arg12[%c0_10, %c0_11] : memref<8x512xf32, #tpu.memory_space<vmem>>, vector<8x512xf32>
      tpu.vector_store %arg12[%c0_10, %c0_11], %12 {strides = array<i32>} : memref<8x512xf32, #tpu.memory_space<vmem>>, vector<8x512xf32>,
    } else {
    }
    %c0 = arith.constant 0 : index
    %c0_1 = arith.constant 0 : index
    %3 = vector.load %arg12[%c0, %c0_1] : memref<8x512xf32, #tpu.memory_space<vmem>>, vector<8x512xf32>
    %c0_2 = arith.constant 0 : index
    %c0_3 = arith.constant 0 : index
    %4 = vector.load %arg1[%c0_2, %c0_3] : memref<8x512xbf16, #tpu.memory_space<vmem>>, vector<8x512xbf16>
    %c0_4 = arith.constant 0 : index
    %c0_5 = arith.constant 0 : index
    %5 = vector.load %arg2[%c0_4, %c0_5] : memref<512x512xbf16, #tpu.memory_space<vmem>>, vector<512x512xbf16>
    %cst = arith.constant dense<0.000000e+00> : vector<8x512xf32>
    %6 = tpu.matmul %4, %5, %cst {dimension_numbers = #tpu.dot_dimension_numbers<[1], [0], [0], [1], [0, 0, 1, 1], [], []>} : vector<8x512xbf16>, vector<512x512xbf16>, vector<8x512xf32> -> vector<8x512xf32>
    %7 = arith.addf %3, %6 : vector<8x512xf32>
    %c0_6 = arith.constant 0 : index
    %c0_7 = arith.constant 0 : index
    %8 = vector.load %arg12[%c0_6, %c0_7] : memref<8x512xf32, #tpu.memory_space<vmem>>, vector<8x512xf32>
    tpu.vector_store %arg12[%c0_6, %c0_7], %7 {strides = array<i32>} : memref<8x512xf32, #tpu.memory_space<vmem>>, vector<8x512xf32>,
    %c1_i32 = arith.constant 1 : i32
    %9 = arith.cmpi eq, %arg0, %c1_i32 : i32
    %10 = arith.extui %9 : i1 to i32
    %c0_i32_8 = arith.constant 0 : i32
    %11 = arith.cmpi ne, %10, %c0_i32_8 : i32
    scf.if %11 {
      %c0_9 = arith.constant 0 : index
      %c0_10 = arith.constant 0 : index
      %12 = vector.load %arg12[%c0_9, %c0_10] : memref<8x512xf32, #tpu.memory_space<vmem>>, vector<8x512xf32>
      %c0_11 = arith.constant 0 : index
      %c0_12 = arith.constant 0 : index
      %13 = vector.load %arg3[%c0_11, %c0_12] : memref<1x512xf32, #tpu.memory_space<vmem>>, vector<1x512xf32>
      %14 = vector.broadcast %13 : vector<1x512xf32> to vector<8x512xf32>
      %15 = arith.addf %12, %14 : vector<8x512xf32>
      %16 = arith.truncf %15 : vector<8x512xf32> to vector<8x512xbf16>
      %c0_13 = arith.constant 0 : index
      %c0_14 = arith.constant 0 : index
      %17 = vector.load %arg4[%c0_13, %c0_14] : memref<512x128xbf16, #tpu.memory_space<vmem>>, vector<512x128xbf16>
      %cst_15 = arith.constant dense<0.000000e+00> : vector<8x128xf32>
      %18 = tpu.matmul %16, %17, %cst_15 {dimension_numbers = #tpu.dot_dimension_numbers<[1], [0], [0], [1], [0, 0, 1, 1], [], []>} : vector<8x512xbf16>, vector<512x128xbf16>, vector<8x128xf32> -> vector<8x128xf32>
      %c0_16 = arith.constant 0 : index
      %c0_17 = arith.constant 0 : index
      %19 = vector.load %arg5[%c0_16, %c0_17] : memref<1x128xf32, #tpu.memory_space<vmem>>, vector<1x128xf32>
      %20 = vector.broadcast %19 : vector<1x128xf32> to vector<8x128xf32>
      %21 = arith.addf %18, %20 : vector<8x128xf32>
      %cst_18 = arith.constant 0.000000e+00 : f32
      %22 = vector.broadcast %cst_18 : f32 to vector<8x128xf32>
      %23 = arith.maximumf %21, %22 : vector<8x128xf32>
      %24 = arith.truncf %23 : vector<8x128xf32> to vector<8x128xbf16>
      %c0_19 = arith.constant 0 : index
      %c0_20 = arith.constant 0 : index
      %25 = vector.load %arg6[%c0_19, %c0_20] : memref<128x128xbf16, #tpu.memory_space<vmem>>, vector<128x128xbf16>
      %cst_21 = arith.constant dense<0.000000e+00> : vector<8x128xf32>
      %26 = tpu.matmul %24, %25, %cst_21 {dimension_numbers = #tpu.dot_dimension_numbers<[1], [0], [0], [1], [0, 0, 1, 1], [], []>} : vector<8x128xbf16>, vector<128x128xbf16>, vector<8x128xf32> -> vector<8x128xf32>
      %c0_22 = arith.constant 0 : index
      %c0_23 = arith.constant 0 : index
      %27 = vector.load %arg7[%c0_22, %c0_23] : memref<1x128xf32, #tpu.memory_space<vmem>>, vector<1x128xf32>
      %28 = vector.broadcast %27 : vector<1x128xf32> to vector<8x128xf32>
      %29 = arith.addf %26, %28 : vector<8x128xf32>
      %30 = arith.truncf %29 : vector<8x128xf32> to vector<8x128xbf16>
      %c0_24 = arith.constant 0 : index
      %c0_25 = arith.constant 0 : index
      %31 = vector.load %arg8[%c0_24, %c0_25] : memref<128x384xbf16, #tpu.memory_space<vmem>>, vector<128x384xbf16>
      %cst_26 = arith.constant dense<0.000000e+00> : vector<8x384xf32>
      %32 = tpu.matmul %30, %31, %cst_26 {dimension_numbers = #tpu.dot_dimension_numbers<[1], [0], [0], [1], [0, 0, 1, 1], [], []>} : vector<8x128xbf16>, vector<128x384xbf16>, vector<8x384xf32> -> vector<8x384xf32>
      %c0_27 = arith.constant 0 : index
      %c0_28 = arith.constant 0 : index
      %33 = vector.load %arg9[%c0_27, %c0_28] : memref<1x384xf32, #tpu.memory_space<vmem>>, vector<1x384xf32>
      %34 = vector.broadcast %33 : vector<1x384xf32> to vector<8x384xf32>
      %35 = arith.addf %32, %34 : vector<8x384xf32>
      %c0_29 = arith.constant 0 : index
      %c0_30 = arith.constant 0 : index
      %36 = vector.load %arg10[%c0_29, %c0_30] : memref<8x128xf32, #tpu.memory_space<vmem>>, vector<8x128xf32>
      tpu.vector_store %arg10[%c0_29, %c0_30], %29 {strides = array<i32>} : memref<8x128xf32, #tpu.memory_space<vmem>>, vector<8x128xf32>,
      %c0_31 = arith.constant 0 : index
      %c0_32 = arith.constant 0 : index
      %37 = vector.load %arg11[%c0_31, %c0_32] : memref<8x384xf32, #tpu.memory_space<vmem>>, vector<8x384xf32>
      tpu.vector_store %arg11[%c0_31, %c0_32], %35 {strides = array<i32>} : memref<8x384xf32, #tpu.memory_space<vmem>>, vector<8x384xf32>,
    } else {
    }
    return
  }
  func.func @transform_0(%arg0: i32) -> (i32, i32) {
    %c0_i32 = arith.constant 0 : i32
    %c0_i32_0 = arith.constant 0 : i32
    return %c0_i32, %arg0 : i32, i32
  }
  func.func @transform_1(%arg0: i32) -> (i32, i32) {
    %c0_i32 = arith.constant 0 : i32
    %c0_i32_0 = arith.constant 0 : i32
    return %arg0, %c0_i32 : i32, i32
  }
  func.func @transform_2(%arg0: i32) -> (i32, i32) {
    %c0_i32 = arith.constant 0 : i32
    %c0_i32_0 = arith.constant 0 : i32
    %c0_i32_1 = arith.constant 0 : i32
    return %c0_i32, %c0_i32_0 : i32, i32
  }
  func.func @transform_3(%arg0: i32) -> (i32, i32) {
    %c0_i32 = arith.constant 0 : i32
    %c0_i32_0 = arith.constant 0 : i32
    %c0_i32_1 = arith.constant 0 : i32
    return %c0_i32, %c0_i32_0 : i32, i32
  }
  func.func @transform_4(%arg0: i32) -> (i32, i32) {
    %c0_i32 = arith.constant 0 : i32
    %c0_i32_0 = arith.constant 0 : i32
    %c0_i32_1 = arith.constant 0 : i32
    return %c0_i32, %c0_i32_0 : i32, i32
  }
  func.func @transform_5(%arg0: i32) -> (i32, i32) {
    %c0_i32 = arith.constant 0 : i32
    %c0_i32_0 = arith.constant 0 : i32
    %c0_i32_1 = arith.constant 0 : i32
    return %c0_i32, %c0_i32_0 : i32, i32
  }
  func.func @transform_6(%arg0: i32) -> (i32, i32) {
    %c0_i32 = arith.constant 0 : i32
    %c0_i32_0 = arith.constant 0 : i32
    %c0_i32_1 = arith.constant 0 : i32
    return %c0_i32, %c0_i32_0 : i32, i32
  }
  func.func @transform_7(%arg0: i32) -> (i32, i32) {
    %c0_i32 = arith.constant 0 : i32
    %c0_i32_0 = arith.constant 0 : i32
    %c0_i32_1 = arith.constant 0 : i32
    return %c0_i32, %c0_i32_0 : i32, i32
  }
  func.func @transform_8(%arg0: i32) -> (i32, i32) {
    %c0_i32 = arith.constant 0 : i32
    %c0_i32_0 = arith.constant 0 : i32
    %c0_i32_1 = arith.constant 0 : i32
    return %c0_i32, %c0_i32_0 : i32, i32
  }
  func.func @transform_9(%arg0: i32) -> (i32, i32) {
    %c0_i32 = arith.constant 0 : i32
    %c0_i32_0 = arith.constant 0 : i32
    %c0_i32_1 = arith.constant 0 : i32
    return %c0_i32, %c0_i32_0 : i32, i32
  }
  func.func @transform_10(%arg0: i32) -> (i32, i32) {
    %c0_i32 = arith.constant 0 : i32
    %c0_i32_0 = arith.constant 0 : i32
    %c0_i32_1 = arith.constant 0 : i32
    return %c0_i32, %c0_i32_0 : i32, i32
  }
}

</mosaic_0001>

<llo_original>
// kernel: _forward.1
$region0: #{_forward.1}
  #allocation0 [shape = 'u32[]', space=smem, size = 0x4, offset = 0x4, fixed_abs, tag = 'smem constant byte address 0x4 - core index']
  #allocation1 [shape = 'u32[144,128]{1,0:T(1,128)}', space=vmem, size = 0x12000, scoped, tag = 'internal scratch']
  #allocation2 [shape = 'f32[8,512]{1,0:T(8,128)}', space=vmem, size = 0x4000, scoped, tag = 'scratch operand']
  %s0 = inlined_call_operand.vmem [shape: bf16[8,1024], index: 0, kind: input, shape index: {}]
  %s1 = inlined_call_operand.vmem [shape: bf16[1024,512], index: 1, kind: input, shape index: {}]
  %s2 = inlined_call_operand.vmem [shape: f32[1,512], index: 2, kind: input, shape index: {}]
  %s3 = inlined_call_operand.vmem [shape: bf16[512,128], index: 3, kind: input, shape index: {}]
  %s4 = inlined_call_operand.vmem [shape: f32[1,128], index: 4, kind: input, shape index: {}]
  %s5 = inlined_call_operand.vmem [shape: bf16[128,128], index: 5, kind: input, shape index: {}]
  %s6 = inlined_call_operand.vmem [shape: f32[1,128], index: 6, kind: input, shape index: {}]
  %s7 = inlined_call_operand.vmem [shape: bf16[128,384], index: 7, kind: input, shape index: {}]
  %s8 = inlined_call_operand.vmem [shape: f32[1,384], index: 8, kind: input, shape index: {}]
  %s9 = inlined_call_operand.hbm [shape: f32[8,128], index: 9, kind: output, shape index: {0}]
  %s10 = inlined_call_operand.hbm [shape: f32[8,384], index: 10, kind: output, shape index: {1}]
  %11 = xla_tuple %s9, %s10
  %s12 = sld [smem:[#allocation0]]
  $region85: #{_forward.1} parent=0
    _
  %s14 = ssub.s32 1, %s12
  %s15 = scalar_select 0, %s14, %s12
  $region1: #{_forward.1} parent=0
    #allocation3 [shape = 'u8[4096]{0}', space=vmem, size = 0x1000, scoped, tag = 'output window, operand 0, single buffered']
    #allocation4 [shape = 's32[2]{0}', space=sflag, size = 0x8, scoped, tag = 'scoped memory for _forward.1']
    #allocation5 [shape = 'u8[12288]{0}', space=vmem, size = 0x3000, scoped, tag = 'output window, operand 1, single buffered']
    #allocation6 [shape = 's32[1]{0}', space=sflag, size = 0x4, scoped, tag = 'scoped memory for _forward.1']
    %16 = vsyncpa [#allocation4], 0
    %17 = vsyncpa [#allocation6], 0
    loop: start=0, step=1, limit=4
    $region2: #{_forward.1} parent=1 // loop_pre_header
      _
    $region3: #{_forward.1} parent=1 // loop_header
      %s19 = sphi 0, %s23
      %p20 = scmp.ge.s32.totalorder %s19, 4
      %s29 = sphi 0, %s31
      %s32 = sphi 0, %s29
      %s33 = sphi 0, %s32
      %s49 = sphi 0, %s33
      %s55 = sphi 0, %s57
      %s58 = sphi 0, %s55
      %s59 = sphi 0, %s58
      %s75 = sphi 0, %s59
      %s79 = sphi 0, %s79
      %s81 = sphi 0, %s79
      %s82 = sphi 0, %s81
      %s96 = sphi 0, %s82
      %s100 = sphi 0, %s100
      %s102 = sphi 0, %s100
      %s103 = sphi 0, %s102
      %s117 = sphi 0, %s103
      %s121 = sphi 0, %s121
      %s123 = sphi 0, %s121
      %s124 = sphi 0, %s123
      %s138 = sphi 0, %s124
      %s142 = sphi 0, %s142
      %s144 = sphi 0, %s142
      %s145 = sphi 0, %s144
      %s159 = sphi 0, %s145
      %s163 = sphi 0, %s163
      %s165 = sphi 0, %s163
      %s166 = sphi 0, %s165
      %s180 = sphi 0, %s166
      %s184 = sphi 0, %s184
      %s186 = sphi 0, %s184
      %s187 = sphi 0, %s186
      %s201 = sphi 0, %s187
      %s205 = sphi 0, %s205
      %s207 = sphi 0, %s205
      %s208 = sphi 0, %s207
      %s222 = sphi 0, %s208
      %s226 = sphi 0, %s226
      %s228 = sphi 0, %s226
      %s229 = sphi 0, %s228
      %s243 = sphi 0, %s229
      %s247 = sphi 0, %s247
      %s249 = sphi 0, %s247
      %s250 = sphi 0, %s249
      %s264 = sphi 0, %s250
    $region4: #{_forward.1} parent=1 // loop_header_branch
      %22 = sbr.rel (%p20) target = $region8
    $region5: #{_forward.1} parent=1 // loop_body
      %s24 = ssub.s32 %s19, 1
      %s25 = ssub.s32 %s19, 2
      %s26 = sadd.s32 %s19, 1
      %s27 = ssub.s32 %s19, %s26
      %p28 = scmp.eq.s32.totalorder %s27, 0
      %s30 = sadd.s32 %s29, 1
      %s31 = scalar_select %p28, %s29, %s30
      %p34 = pneg %p28
      %p35 = scmp.eq.s32.totalorder %s19, 1
      %p36 = por %p34, %p35
      %p37 = scmp.ne.s32.totalorder %s29, %s32
      %p38 = scmp.eq.s32.totalorder %s19, 0
      %p39 = por %p37, %p38
      %p40 = scmp.ne.s32.totalorder %s29, %s32
      %p41 = scmp.eq.s32.totalorder %s24, 1
      %p42 = por %p40, %p41
      %p43 = scmp.ne.s32.totalorder %s32, %s33
      %p44 = scmp.eq.s32.totalorder %s24, 0
      %p45 = por %p43, %p44
      %p46 = scmp.ne.s32.totalorder %s32, %s33
      %p47 = scmp.eq.s32.totalorder %s25, 1
      %p48 = por %p46, %p47
      %p50 = scmp.ne.s32.totalorder %s33, %s49
      %p51 = scmp.eq.s32.totalorder %s25, 0
      %p52 = por %p50, %p51
      %s53 = ssub.s32 %s19, %s26
      %p54 = scmp.eq.s32.totalorder %s53, 0
      %s56 = sadd.s32 %s55, 1
      %s57 = scalar_select %p54, %s55, %s56
      %p60 = pneg %p54
      %p61 = scmp.eq.s32.totalorder %s19, 1
      %p62 = por %p60, %p61
      %p63 = scmp.ne.s32.totalorder %s55, %s58
      %p64 = scmp.eq.s32.totalorder %s19, 0
      %p65 = por %p63, %p64
      %p66 = scmp.ne.s32.totalorder %s55, %s58
      %p67 = scmp.eq.s32.totalorder %s24, 1
      %p68 = por %p66, %p67
      %p69 = scmp.ne.s32.totalorder %s58, %s59
      %p70 = scmp.eq.s32.totalorder %s24, 0
      %p71 = por %p69, %p70
      %p72 = scmp.ne.s32.totalorder %s58, %s59
      %p73 = scmp.eq.s32.totalorder %s25, 1
      %p74 = por %p72, %p73
      %p76 = scmp.ne.s32.totalorder %s59, %s75
      %p77 = scmp.eq.s32.totalorder %s25, 0
      %p78 = por %p76, %p77
      %s80 = sadd.s32 %s79, 1
      %p83 = scmp.eq.s32.totalorder %s19, 1
      %p84 = scmp.ne.s32.totalorder %s79, %s81
      %p85 = scmp.eq.s32.totalorder %s19, 0
      %p86 = por %p84, %p85
      %p87 = scmp.ne.s32.totalorder %s79, %s81
      %p88 = scmp.eq.s32.totalorder %s24, 1
      %p89 = por %p87, %p88
      %p90 = scmp.ne.s32.totalorder %s81, %s82
      %p91 = scmp.eq.s32.totalorder %s24, 0
      %p92 = por %p90, %p91
      %p93 = scmp.ne.s32.totalorder %s81, %s82
      %p94 = scmp.eq.s32.totalorder %s25, 1
      %p95 = por %p93, %p94
      %p97 = scmp.ne.s32.totalorder %s82, %s96
      %p98 = scmp.eq.s32.totalorder %s25, 0
      %p99 = por %p97, %p98
      %s101 = sadd.s32 %s100, 1
      %p104 = scmp.eq.s32.totalorder %s19, 1
      %p105 = scmp.ne.s32.totalorder %s100, %s102
      %p106 = scmp.eq.s32.totalorder %s19, 0
      %p107 = por %p105, %p106
      %p108 = scmp.ne.s32.totalorder %s100, %s102
      %p109 = scmp.eq.s32.totalorder %s24, 1
      %p110 = por %p108, %p109
      %p111 = scmp.ne.s32.totalorder %s102, %s103
      %p112 = scmp.eq.s32.totalorder %s24, 0
      %p113 = por %p111, %p112
      %p114 = scmp.ne.s32.totalorder %s102, %s103
      %p115 = scmp.eq.s32.totalorder %s25, 1
      %p116 = por %p114, %p115
      %p118 = scmp.ne.s32.totalorder %s103, %s117
      %p119 = scmp.eq.s32.totalorder %s25, 0
      %p120 = por %p118, %p119
      %s122 = sadd.s32 %s121, 1
      %p125 = scmp.eq.s32.totalorder %s19, 1
      %p126 = scmp.ne.s32.totalorder %s121, %s123
      %p127 = scmp.eq.s32.totalorder %s19, 0
      %p128 = por %p126, %p127
      %p129 = scmp.ne.s32.totalorder %s121, %s123
      %p130 = scmp.eq.s32.totalorder %s24, 1
      %p131 = por %p129, %p130
      %p132 = scmp.ne.s32.totalorder %s123, %s124
      %p133 = scmp.eq.s32.totalorder %s24, 0
      %p134 = por %p132, %p133
      %p135 = scmp.ne.s32.totalorder %s123, %s124
      %p136 = scmp.eq.s32.totalorder %s25, 1
      %p137 = por %p135, %p136
      %p139 = scmp.ne.s32.totalorder %s124, %s138
      %p140 = scmp.eq.s32.totalorder %s25, 0
      %p141 = por %p139, %p140
      %s143 = sadd.s32 %s142, 1
      %p146 = scmp.eq.s32.totalorder %s19, 1
      %p147 = scmp.ne.s32.totalorder %s142, %s144
      %p148 = scmp.eq.s32.totalorder %s19, 0
      %p149 = por %p147, %p148
      %p150 = scmp.ne.s32.totalorder %s142, %s144
      %p151 = scmp.eq.s32.totalorder %s24, 1
      %p152 = por %p150, %p151
      %p153 = scmp.ne.s32.totalorder %s144, %s145
      %p154 = scmp.eq.s32.totalorder %s24, 0
      %p155 = por %p153, %p154
      %p156 = scmp.ne.s32.totalorder %s144, %s145
      %p157 = scmp.eq.s32.totalorder %s25, 1
      %p158 = por %p156, %p157
      %p160 = scmp.ne.s32.totalorder %s145, %s159
      %p161 = scmp.eq.s32.totalorder %s25, 0
      %p162 = por %p160, %p161
      %s164 = sadd.s32 %s163, 1
      %p167 = scmp.eq.s32.totalorder %s19, 1
      %p168 = scmp.ne.s32.totalorder %s163, %s165
      %p169 = scmp.eq.s32.totalorder %s19, 0
      %p170 = por %p168, %p169
      %p171 = scmp.ne.s32.totalorder %s163, %s165
      %p172 = scmp.eq.s32.totalorder %s24, 1
      %p173 = por %p171, %p172
      %p174 = scmp.ne.s32.totalorder %s165, %s166
      %p175 = scmp.eq.s32.totalorder %s24, 0
      %p176 = por %p174, %p175
      %p177 = scmp.ne.s32.totalorder %s165, %s166
      %p178 = scmp.eq.s32.totalorder %s25, 1
      %p179 = por %p177, %p178
      %p181 = scmp.ne.s32.totalorder %s166, %s180
      %p182 = scmp.eq.s32.totalorder %s25, 0
      %p183 = por %p181, %p182
      %s185 = sadd.s32 %s184, 1
      %p188 = scmp.eq.s32.totalorder %s19, 1
      %p189 = scmp.ne.s32.totalorder %s184, %s186
      %p190 = scmp.eq.s32.totalorder %s19, 0
      %p191 = por %p189, %p190
      %p192 = scmp.ne.s32.totalorder %s184, %s186
      %p193 = scmp.eq.s32.totalorder %s24, 1
      %p194 = por %p192, %p193
      %p195 = scmp.ne.s32.totalorder %s186, %s187
      %p196 = scmp.eq.s32.totalorder %s24, 0
      %p197 = por %p195, %p196
      %p198 = scmp.ne.s32.totalorder %s186, %s187
      %p199 = scmp.eq.s32.totalorder %s25, 1
      %p200 = por %p198, %p199
      %p202 = scmp.ne.s32.totalorder %s187, %s201
      %p203 = scmp.eq.s32.totalorder %s25, 0
      %p204 = por %p202, %p203
      %s206 = sadd.s32 %s205, 1
      %p209 = scmp.eq.s32.totalorder %s19, 1
      %p210 = scmp.ne.s32.totalorder %s205, %s207
      %p211 = scmp.eq.s32.totalorder %s19, 0
      %p212 = por %p210, %p211
      %p213 = scmp.ne.s32.totalorder %s205, %s207
      %p214 = scmp.eq.s32.totalorder %s24, 1
      %p215 = por %p213, %p214
      %p216 = scmp.ne.s32.totalorder %s207, %s208
      %p217 = scmp.eq.s32.totalorder %s24, 0
      %p218 = por %p216, %p217
      %p219 = scmp.ne.s32.totalorder %s207, %s208
      %p220 = scmp.eq.s32.totalorder %s25, 1
      %p221 = por %p219, %p220
      %p223 = scmp.ne.s32.totalorder %s208, %s222
      %p224 = scmp.eq.s32.totalorder %s25, 0
      %p225 = por %p223, %p224
      %s227 = sadd.s32 %s226, 1
      %p230 = scmp.eq.s32.totalorder %s19, 1
      %p231 = scmp.ne.s32.totalorder %s226, %s228
      %p232 = scmp.eq.s32.totalorder %s19, 0
      %p233 = por %p231, %p232
      %p234 = scmp.ne.s32.totalorder %s226, %s228
      %p235 = scmp.eq.s32.totalorder %s24, 1
      %p236 = por %p234, %p235
      %p237 = scmp.ne.s32.totalorder %s228, %s229
      %p238 = scmp.eq.s32.totalorder %s24, 0
      %p239 = por %p237, %p238
      %p240 = scmp.ne.s32.totalorder %s228, %s229
      %p241 = scmp.eq.s32.totalorder %s25, 1
      %p242 = por %p240, %p241
      %p244 = scmp.ne.s32.totalorder %s229, %s243
      %p245 = scmp.eq.s32.totalorder %s25, 0
      %p246 = por %p244, %p245
      %s248 = sadd.s32 %s247, 1
      %p251 = scmp.eq.s32.totalorder %s19, 1
      %p252 = scmp.ne.s32.totalorder %s247, %s249
      %p253 = scmp.eq.s32.totalorder %s19, 0
      %p254 = por %p252, %p253
      %p255 = scmp.ne.s32.totalorder %s247, %s249
      %p256 = scmp.eq.s32.totalorder %s24, 1
      %p257 = por %p255, %p256
      %p258 = scmp.ne.s32.totalorder %s249, %s250
      %p259 = scmp.eq.s32.totalorder %s24, 0
      %p260 = por %p258, %p259
      %p261 = scmp.ne.s32.totalorder %s249, %s250
      %p262 = scmp.eq.s32.totalorder %s25, 1
      %p263 = por %p261, %p262
      %p265 = scmp.ne.s32.totalorder %s250, %s264
      %p266 = scmp.eq.s32.totalorder %s25, 0
      %p267 = por %p265, %p266
      %p268 = scmp.le.s32.totalorder 1, %s19
      %p269 = scmp.lt.s32.totalorder %s19, 3
      %p270 = pnand %p268, %p269
      %p271 = pneg %p270
      // Predicated region
      $region9: #{_forward.1} parent=5 // pred_check
        _
      $region10: #{_forward.1} parent=5 // pred_check_branch
        %273 = sbr.rel (%p270) target = $region12
      $region11: #{_forward.1} parent=5 // pred_region
        %s274 = ssub.s32 %s19, 1
        // Predicated region
        $region13: #{_forward.1} parent=11 // pred_check
          %p275 = pneg %p92
        $region14: #{_forward.1} parent=11 // pred_check_branch
          %277 = sbr.rel (%p275) target = $region16
        $region15: #{_forward.1} parent=11 // pred_region
          _
        $region16: #{_forward.1} parent=11 // pred_fallthru
          _
        // Predicated region
        $region17: #{_forward.1} parent=11 // pred_check
          %p278 = pneg %p113
        $region18: #{_forward.1} parent=11 // pred_check_branch
          %280 = sbr.rel (%p278) target = $region20
        $region19: #{_forward.1} parent=11 // pred_region
          _
        $region20: #{_forward.1} parent=11 // pred_fallthru
          _
        // Predicated region
        $region21: #{_forward.1} parent=11 // pred_check
          %p281 = pneg %p134
        $region22: #{_forward.1} parent=11 // pred_check_branch
          %283 = sbr.rel (%p281) target = $region24
        $region23: #{_forward.1} parent=11 // pred_region
          _
        $region24: #{_forward.1} parent=11 // pred_fallthru
          _
        // Predicated region
        $region25: #{_forward.1} parent=11 // pred_check
          %p284 = pneg %p155
        $region26: #{_forward.1} parent=11 // pred_check_branch
          %286 = sbr.rel (%p284) target = $region28
        $region27: #{_forward.1} parent=11 // pred_region
          _
        $region28: #{_forward.1} parent=11 // pred_fallthru
          _
        // Predicated region
        $region29: #{_forward.1} parent=11 // pred_check
          %p287 = pneg %p176
        $region30: #{_forward.1} parent=11 // pred_check_branch
          %289 = sbr.rel (%p287) target = $region32
        $region31: #{_forward.1} parent=11 // pred_region
          _
        $region32: #{_forward.1} parent=11 // pred_fallthru
          _
        // Predicated region
        $region33: #{_forward.1} parent=11 // pred_check
          %p290 = pneg %p197
        $region34: #{_forward.1} parent=11 // pred_check_branch
          %292 = sbr.rel (%p290) target = $region36
        $region35: #{_forward.1} parent=11 // pred_region
          _
        $region36: #{_forward.1} parent=11 // pred_fallthru
          _
        // Predicated region
        $region37: #{_forward.1} parent=11 // pred_check
          %p293 = pneg %p218
        $region38: #{_forward.1} parent=11 // pred_check_branch
          %295 = sbr.rel (%p293) target = $region40
        $region39: #{_forward.1} parent=11 // pred_region
          _
        $region40: #{_forward.1} parent=11 // pred_fallthru
          _
      $region12: #{_forward.1} parent=5 // pred_fallthru
        _
      %p296 = scmp.lt.s32.totalorder %s19, 2
      // Predicated region
      $region41: #{_forward.1} parent=5 // pred_check
        %p297 = pneg %p296
      $region42: #{_forward.1} parent=5 // pred_check_branch
        %299 = sbr.rel (%p297) target = $region44
      $region43: #{_forward.1} parent=5 // pred_region
        // Predicated region
        $region45: #{_forward.1} parent=43 // pred_check
          %p300 = pneg %p39
        $region46: #{_forward.1} parent=43 // pred_check_branch
          %302 = sbr.rel (%p300) target = $region48
        $region47: #{_forward.1} parent=43 // pred_region
          %s303 = smul.u32 4, %s19
          %p304 = scmp.lt.s32.totalorder %s303, 7
          %s305 = scalar_select %p304, %s303, 7
          %s306 = smul.addr %s305, 4
          %s307 = scalar_lea.vmem %s0, %s306
          %s308 = smul.u32 4, %s19
        $region48: #{_forward.1} parent=43 // pred_fallthru
          _
        // Predicated region
        $region49: #{_forward.1} parent=43 // pred_check
          %p309 = pneg %p65
        $region50: #{_forward.1} parent=43 // pred_check_branch
          %311 = sbr.rel (%p309) target = $region52
        $region51: #{_forward.1} parent=43 // pred_region
          %s312 = smul.u32 64, %s19
          %p313 = scmp.lt.s32.totalorder %s312, 127
          %s314 = scalar_select %p313, %s312, 127
          %s315 = smul.addr %s314, 4
          %s316 = smul.addr %s315, 4
          %s317 = scalar_lea.vmem %s1, %s316
          %s318 = smul.u32 64, %s19
        $region52: #{_forward.1} parent=43 // pred_fallthru
          _
      $region44: #{_forward.1} parent=5 // pred_fallthru
        _
      %p319 = scmp.le.s32.totalorder 1, %s19
      %p320 = scmp.lt.s32.totalorder %s19, 3
      %p321 = pnand %p319, %p320
      %p322 = pneg %p321
      // Predicated region
      $region53: #{_forward.1} parent=5 // pred_check
        _
      $region54: #{_forward.1} parent=5 // pred_check_branch
        %324 = sbr.rel (%p321) target = $region56
      $region55: #{_forward.1} parent=5 // pred_region
        %s325 = ssub.s32 %s19, 1
        %s326 = smul.u32 4, %s24
        %p327 = scmp.lt.s32.totalorder %s326, 7
        %s328 = scalar_select %p327, %s326, 7
        %s329 = smul.addr %s328, 4
        %s330 = scalar_lea.vmem %s0, %s329
        %p331 = pneg %p45
        %p332 = pneg %p42
        %s333 = smul.u32 64, %s24
        %p334 = scmp.lt.s32.totalorder %s333, 127
        %s335 = scalar_select %p334, %s333, 127
        %s336 = smul.addr %s335, 4
        %s337 = smul.addr %s336, 4
        %s338 = scalar_lea.vmem %s1, %s337
        %p339 = pneg %p71
        %p340 = pneg %p68
        %p341 = pneg %p92
        %p342 = pneg %p89
        %p343 = pneg %p113
        %p344 = pneg %p110
        %p345 = pneg %p134
        %p346 = pneg %p131
        %p347 = pneg %p155
        %p348 = pneg %p152
        %p349 = pneg %p176
        %p350 = pneg %p173
        %p351 = pneg %p197
        %p352 = pneg %p194
        %p353 = pneg %p218
        %p354 = pneg %p215
        %p355 = pneg %p239
        %p356 = pneg %p236
        %p357 = pneg %p260
        %p358 = pneg %p257
        %s359 = smul.u32 4, %s24
        %p360 = scmp.lt.s32.totalorder %s359, 7
        %s361 = scalar_select %p360, %s359, 7
        %s362 = smul.addr %s361, 4
        %s363 = scalar_lea.vmem %s0, %s362
        %s364 = smul.u32 4, %s24
        %s365 = smul.u32 64, %s24
        %p366 = scmp.lt.s32.totalorder %s365, 127
        %s367 = scalar_select %p366, %s365, 127
        %s368 = smul.addr %s367, 4
        %s369 = smul.addr %s368, 4
        %s370 = scalar_lea.vmem %s1, %s369
        %s371 = smul.u32 64, %s24
        %p373 = scmp.eq.s32.totalorder %s24, 0
        // Predicated region
        $region57: #{_forward.1} parent=55 // pred_check
          %p374 = pneg %p373
        $region58: #{_forward.1} parent=55 // pred_check_branch
          %376 = sbr.rel (%p374) target = $region60
        $region59: #{_forward.1} parent=55 // pred_region
          %377 = vst [vmem:[#allocation2] sm:$0xff] 0.0
          %378 = vst [vmem:[#allocation2 + $0x8] sm:$0xff] 0.0
          %379 = vst [vmem:[#allocation2 + $0x10] sm:$0xff] 0.0
          %380 = vst [vmem:[#allocation2 + $0x18] sm:$0xff] 0.0
        $region60: #{_forward.1} parent=55 // pred_fallthru
          _
        %v381 = vld [vmem:[#allocation2] sm:$0xff]
        %v382 = vld [vmem:[#allocation2 + $0x8] sm:$0xff]
        %v383 = vld [vmem:[#allocation2 + $0x10] sm:$0xff]
        %v384 = vld [vmem:[#allocation2 + $0x18] sm:$0xff]
        %v385 = vld [vmem:[%s363] sm:$0xff]
        %v386 = vld [vmem:[%s363 + $0x8] sm:$0xff]
        %v387 = vld [vmem:[%s370] sm:$0xff]
        %v388 = vld [vmem:[%s370 + $0x8] sm:$0xff]
        %v389 = vld [vmem:[%s370 + $0x10] sm:$0xff]
        %v390 = vld [vmem:[%s370 + $0x18] sm:$0xff]
        %v391 = vld [vmem:[%s370 + $0x20] sm:$0xff]
        %v392 = vld [vmem:[%s370 + $0x28] sm:$0xff]
        %v393 = vld [vmem:[%s370 + $0x30] sm:$0xff]
        %v394 = vld [vmem:[%s370 + $0x38] sm:$0xff]
        %v395 = vld [vmem:[%s370 + $0x40] sm:$0xff]
        %v396 = vld [vmem:[%s370 + $0x48] sm:$0xff]
        %v397 = vld [vmem:[%s370 + $0x50] sm:$0xff]
        %v398 = vld [vmem:[%s370 + $0x58] sm:$0xff]
        %v399 = vld [vmem:[%s370 + $0x60] sm:$0xff]
        %v400 = vld [vmem:[%s370 + $0x68] sm:$0xff]
        %v401 = vld [vmem:[%s370 + $0x70] sm:$0xff]
        %v402 = vld [vmem:[%s370 + $0x78] sm:$0xff]
        %v403 = vld [vmem:[%s370 + $0x80] sm:$0xff]
        %v404 = vld [vmem:[%s370 + $0x88] sm:$0xff]
        %v405 = vld [vmem:[%s370 + $0x90] sm:$0xff]
        %v406 = vld [vmem:[%s370 + $0x98] sm:$0xff]
        %v407 = vld [vmem:[%s370 + $0xa0] sm:$0xff]
        %v408 = vld [vmem:[%s370 + $0xa8] sm:$0xff]
        %v409 = vld [vmem:[%s370 + $0xb0] sm:$0xff]
        %v410 = vld [vmem:[%s370 + $0xb8] sm:$0xff]
        %v411 = vld [vmem:[%s370 + $0xc0] sm:$0xff]
        %v412 = vld [vmem:[%s370 + $0xc8] sm:$0xff]
        %v413 = vld [vmem:[%s370 + $0xd0] sm:$0xff]
        %v414 = vld [vmem:[%s370 + $0xd8] sm:$0xff]
        %v415 = vld [vmem:[%s370 + $0xe0] sm:$0xff]
        %v416 = vld [vmem:[%s370 + $0xe8] sm:$0xff]
        %v417 = vld [vmem:[%s370 + $0xf0] sm:$0xff]
        %v418 = vld [vmem:[%s370 + $0xf8] sm:$0xff]
        %v419 = vld [vmem:[%s370 + $0x100] sm:$0xff]
        %v420 = vld [vmem:[%s370 + $0x108] sm:$0xff]
        %v421 = vld [vmem:[%s370 + $0x110] sm:$0xff]
        %v422 = vld [vmem:[%s370 + $0x118] sm:$0xff]
        %v423 = vld [vmem:[%s370 + $0x120] sm:$0xff]
        %v424 = vld [vmem:[%s370 + $0x128] sm:$0xff]
        %v425 = vld [vmem:[%s370 + $0x130] sm:$0xff]
        %v426 = vld [vmem:[%s370 + $0x138] sm:$0xff]
        %v427 = vld [vmem:[%s370 + $0x140] sm:$0xff]
        %v428 = vld [vmem:[%s370 + $0x148] sm:$0xff]
        %v429 = vld [vmem:[%s370 + $0x150] sm:$0xff]
        %v430 = vld [vmem:[%s370 + $0x158] sm:$0xff]
        %v431 = vld [vmem:[%s370 + $0x160] sm:$0xff]
        %v432 = vld [vmem:[%s370 + $0x168] sm:$0xff]
        %v433 = vld [vmem:[%s370 + $0x170] sm:$0xff]
        %v434 = vld [vmem:[%s370 + $0x178] sm:$0xff]
        %v435 = vld [vmem:[%s370 + $0x180] sm:$0xff]
        %v436 = vld [vmem:[%s370 + $0x188] sm:$0xff]
        %v437 = vld [vmem:[%s370 + $0x190] sm:$0xff]
        %v438 = vld [vmem:[%s370 + $0x198] sm:$0xff]
        %v439 = vld [vmem:[%s370 + $0x1a0] sm:$0xff]
        %v440 = vld [vmem:[%s370 + $0x1a8] sm:$0xff]
        %v441 = vld [vmem:[%s370 + $0x1b0] sm:$0xff]
        %v442 = vld [vmem:[%s370 + $0x1b8] sm:$0xff]
        %v443 = vld [vmem:[%s370 + $0x1c0] sm:$0xff]
        %v444 = vld [vmem:[%s370 + $0x1c8] sm:$0xff]
        %v445 = vld [vmem:[%s370 + $0x1d0] sm:$0xff]
        %v446 = vld [vmem:[%s370 + $0x1d8] sm:$0xff]
        %v447 = vld [vmem:[%s370 + $0x1e0] sm:$0xff]
        %v448 = vld [vmem:[%s370 + $0x1e8] sm:$0xff]
        %v449 = vld [vmem:[%s370 + $0x1f0] sm:$0xff]
        %v450 = vld [vmem:[%s370 + $0x1f8] sm:$0xff]
        %v451 = vld [vmem:[%s370 + $0x200] sm:$0xff]
        %v452 = vld [vmem:[%s370 + $0x208] sm:$0xff]
        %v453 = vld [vmem:[%s370 + $0x210] sm:$0xff]
        %v454 = vld [vmem:[%s370 + $0x218] sm:$0xff]
        %v455 = vld [vmem:[%s370 + $0x220] sm:$0xff]
        %v456 = vld [vmem:[%s370 + $0x228] sm:$0xff]
        %v457 = vld [vmem:[%s370 + $0x230] sm:$0xff]
        %v458 = vld [vmem:[%s370 + $0x238] sm:$0xff]
        %v459 = vld [vmem:[%s370 + $0x240] sm:$0xff]
        %v460 = vld [vmem:[%s370 + $0x248] sm:$0xff]
        %v461 = vld [vmem:[%s370 + $0x250] sm:$0xff]
        %v462 = vld [vmem:[%s370 + $0x258] sm:$0xff]
        %v463 = vld [vmem:[%s370 + $0x260] sm:$0xff]
        %v464 = vld [vmem:[%s370 + $0x268] sm:$0xff]
        %v465 = vld [vmem:[%s370 + $0x270] sm:$0xff]
        %v466 = vld [vmem:[%s370 + $0x278] sm:$0xff]
        %v467 = vld [vmem:[%s370 + $0x280] sm:$0xff]
        %v468 = vld [vmem:[%s370 + $0x288] sm:$0xff]
        %v469 = vld [vmem:[%s370 + $0x290] sm:$0xff]
        %v470 = vld [vmem:[%s370 + $0x298] sm:$0xff]
        %v471 = vld [vmem:[%s370 + $0x2a0] sm:$0xff]
        %v472 = vld [vmem:[%s370 + $0x2a8] sm:$0xff]
        %v473 = vld [vmem:[%s370 + $0x2b0] sm:$0xff]
        %v474 = vld [vmem:[%s370 + $0x2b8] sm:$0xff]
        %v475 = vld [vmem:[%s370 + $0x2c0] sm:$0xff]
        %v476 = vld [vmem:[%s370 + $0x2c8] sm:$0xff]
        %v477 = vld [vmem:[%s370 + $0x2d0] sm:$0xff]
        %v478 = vld [vmem:[%s370 + $0x2d8] sm:$0xff]
        %v479 = vld [vmem:[%s370 + $0x2e0] sm:$0xff]
        %v480 = vld [vmem:[%s370 + $0x2e8] sm:$0xff]
        %v481 = vld [vmem:[%s370 + $0x2f0] sm:$0xff]
        %v482 = vld [vmem:[%s370 + $0x2f8] sm:$0xff]
        %v483 = vld [vmem:[%s370 + $0x300] sm:$0xff]
        %v484 = vld [vmem:[%s370 + $0x308] sm:$0xff]
        %v485 = vld [vmem:[%s370 + $0x310] sm:$0xff]
        %v486 = vld [vmem:[%s370 + $0x318] sm:$0xff]
        %v487 = vld [vmem:[%s370 + $0x320] sm:$0xff]
        %v488 = vld [vmem:[%s370 + $0x328] sm:$0xff]
        %v489 = vld [vmem:[%s370 + $0x330] sm:$0xff]
        %v490 = vld [vmem:[%s370 + $0x338] sm:$0xff]
        %v491 = vld [vmem:[%s370 + $0x340] sm:$0xff]
        %v492 = vld [vmem:[%s370 + $0x348] sm:$0xff]
        %v493 = vld [vmem:[%s370 + $0x350] sm:$0xff]
        %v494 = vld [vmem:[%s370 + $0x358] sm:$0xff]
        %v495 = vld [vmem:[%s370 + $0x360] sm:$0xff]
        %v496 = vld [vmem:[%s370 + $0x368] sm:$0xff]
        %v497 = vld [vmem:[%s370 + $0x370] sm:$0xff]
        %v498 = vld [vmem:[%s370 + $0x378] sm:$0xff]
        %v499 = vld [vmem:[%s370 + $0x380] sm:$0xff]
        %v500 = vld [vmem:[%s370 + $0x388] sm:$0xff]
        %v501 = vld [vmem:[%s370 + $0x390] sm:$0xff]
        %v502 = vld [vmem:[%s370 + $0x398] sm:$0xff]
        %v503 = vld [vmem:[%s370 + $0x3a0] sm:$0xff]
        %v504 = vld [vmem:[%s370 + $0x3a8] sm:$0xff]
        %v505 = vld [vmem:[%s370 + $0x3b0] sm:$0xff]
        %v506 = vld [vmem:[%s370 + $0x3b8] sm:$0xff]
        %v507 = vld [vmem:[%s370 + $0x3c0] sm:$0xff]
        %v508 = vld [vmem:[%s370 + $0x3c8] sm:$0xff]
        %v509 = vld [vmem:[%s370 + $0x3d0] sm:$0xff]
        %v510 = vld [vmem:[%s370 + $0x3d8] sm:$0xff]
        %v511 = vld [vmem:[%s370 + $0x3e0] sm:$0xff]
        %v512 = vld [vmem:[%s370 + $0x3e8] sm:$0xff]
        %v513 = vld [vmem:[%s370 + $0x3f0] sm:$0xff]
        %v514 = vld [vmem:[%s370 + $0x3f8] sm:$0xff]
        %v517 = vunpack.c.l.b16 %v385
        %v518 = vunpack.c.h.b16 %v385
        %v519 = vunpack.c.l.b16 %v386
        %v520 = vunpack.c.h.b16 %v386
        %v521 = vpack.c.b16 %v517, %v517
        %v522 = vpack.c.b16 %v518, %v518
        %v523 = vpack.c.b16 %v519, %v519
        %v524 = vpack.c.b16 %v520, %v520
        %v657 = vunpack.c.l.b16 %v387
        %v658 = vunpack.c.h.b16 %v387
        %v659 = vunpack.c.l.b16 %v388
        %v660 = vunpack.c.h.b16 %v388
        %v661 = vunpack.c.l.b16 %v389
        %v662 = vunpack.c.h.b16 %v389
        %v663 = vunpack.c.l.b16 %v390
        %v664 = vunpack.c.h.b16 %v390
        %v665 = vunpack.c.l.b16 %v391
        %v666 = vunpack.c.h.b16 %v391
        %v667 = vunpack.c.l.b16 %v392
        %v668 = vunpack.c.h.b16 %v392
        %v669 = vunpack.c.l.b16 %v393
        %v670 = vunpack.c.h.b16 %v393
        %v671 = vunpack.c.l.b16 %v394
        %v672 = vunpack.c.h.b16 %v394
        %v673 = vunpack.c.l.b16 %v395
        %v674 = vunpack.c.h.b16 %v395
        %v675 = vunpack.c.l.b16 %v396
        %v676 = vunpack.c.h.b16 %v396
        %v677 = vunpack.c.l.b16 %v397
        %v678 = vunpack.c.h.b16 %v397
        %v679 = vunpack.c.l.b16 %v398
        %v680 = vunpack.c.h.b16 %v398
        %v681 = vunpack.c.l.b16 %v399
        %v682 = vunpack.c.h.b16 %v399
        %v683 = vunpack.c.l.b16 %v400
        %v684 = vunpack.c.h.b16 %v400
        %v685 = vunpack.c.l.b16 %v401
        %v686 = vunpack.c.h.b16 %v401
        %v687 = vunpack.c.l.b16 %v402
        %v688 = vunpack.c.h.b16 %v402
        %v689 = vunpack.c.l.b16 %v403
        %v690 = vunpack.c.h.b16 %v403
        %v691 = vunpack.c.l.b16 %v404
        %v692 = vunpack.c.h.b16 %v404
        %v693 = vunpack.c.l.b16 %v405
        %v694 = vunpack.c.h.b16 %v405
        %v695 = vunpack.c.l.b16 %v406
        %v696 = vunpack.c.h.b16 %v406
        %v697 = vunpack.c.l.b16 %v407
        %v698 = vunpack.c.h.b16 %v407
        %v699 = vunpack.c.l.b16 %v408
        %v700 = vunpack.c.h.b16 %v408
        %v701 = vunpack.c.l.b16 %v409
        %v702 = vunpack.c.h.b16 %v409
        %v703 = vunpack.c.l.b16 %v410
        %v704 = vunpack.c.h.b16 %v410
        %v705 = vunpack.c.l.b16 %v411
        %v706 = vunpack.c.h.b16 %v411
        %v707 = vunpack.c.l.b16 %v412
        %v708 = vunpack.c.h.b16 %v412
        %v709 = vunpack.c.l.b16 %v413
        %v710 = vunpack.c.h.b16 %v413
        %v711 = vunpack.c.l.b16 %v414
        %v712 = vunpack.c.h.b16 %v414
        %v713 = vunpack.c.l.b16 %v415
        %v714 = vunpack.c.h.b16 %v415
        %v715 = vunpack.c.l.b16 %v416
        %v716 = vunpack.c.h.b16 %v416
        %v717 = vunpack.c.l.b16 %v417
        %v718 = vunpack.c.h.b16 %v417
        %v719 = vunpack.c.l.b16 %v418
        %v720 = vunpack.c.h.b16 %v418
        %v721 = vunpack.c.l.b16 %v419
        %v722 = vunpack.c.h.b16 %v419
        %v723 = vunpack.c.l.b16 %v420
        %v724 = vunpack.c.h.b16 %v420
        %v725 = vunpack.c.l.b16 %v421
        %v726 = vunpack.c.h.b16 %v421
        %v727 = vunpack.c.l.b16 %v422
        %v728 = vunpack.c.h.b16 %v422
        %v729 = vunpack.c.l.b16 %v423
        %v730 = vunpack.c.h.b16 %v423
        %v731 = vunpack.c.l.b16 %v424
        %v732 = vunpack.c.h.b16 %v424
        %v733 = vunpack.c.l.b16 %v425
        %v734 = vunpack.c.h.b16 %v425
        %v735 = vunpack.c.l.b16 %v426
        %v736 = vunpack.c.h.b16 %v426
        %v737 = vunpack.c.l.b16 %v427
        %v738 = vunpack.c.h.b16 %v427
        %v739 = vunpack.c.l.b16 %v428
        %v740 = vunpack.c.h.b16 %v428
        %v741 = vunpack.c.l.b16 %v429
        %v742 = vunpack.c.h.b16 %v429
        %v743 = vunpack.c.l.b16 %v430
        %v744 = vunpack.c.h.b16 %v430
        %v745 = vunpack.c.l.b16 %v431
        %v746 = vunpack.c.h.b16 %v431
        %v747 = vunpack.c.l.b16 %v432
        %v748 = vunpack.c.h.b16 %v432
        %v749 = vunpack.c.l.b16 %v433
        %v750 = vunpack.c.h.b16 %v433
        %v751 = vunpack.c.l.b16 %v434
        %v752 = vunpack.c.h.b16 %v434
        %v753 = vunpack.c.l.b16 %v435
        %v754 = vunpack.c.h.b16 %v435
        %v755 = vunpack.c.l.b16 %v436
        %v756 = vunpack.c.h.b16 %v436
        %v757 = vunpack.c.l.b16 %v437
        %v758 = vunpack.c.h.b16 %v437
        %v759 = vunpack.c.l.b16 %v438
        %v760 = vunpack.c.h.b16 %v438
        %v761 = vunpack.c.l.b16 %v439
        %v762 = vunpack.c.h.b16 %v439
        %v763 = vunpack.c.l.b16 %v440
        %v764 = vunpack.c.h.b16 %v440
        %v765 = vunpack.c.l.b16 %v441
        %v766 = vunpack.c.h.b16 %v441
        %v767 = vunpack.c.l.b16 %v442
        %v768 = vunpack.c.h.b16 %v442
        %v769 = vunpack.c.l.b16 %v443
        %v770 = vunpack.c.h.b16 %v443
        %v771 = vunpack.c.l.b16 %v444
        %v772 = vunpack.c.h.b16 %v444
        %v773 = vunpack.c.l.b16 %v445
        %v774 = vunpack.c.h.b16 %v445
        %v775 = vunpack.c.l.b16 %v446
        %v776 = vunpack.c.h.b16 %v446
        %v777 = vunpack.c.l.b16 %v447
        %v778 = vunpack.c.h.b16 %v447
        %v779 = vunpack.c.l.b16 %v448
        %v780 = vunpack.c.h.b16 %v448
        %v781 = vunpack.c.l.b16 %v449
        %v782 = vunpack.c.h.b16 %v449
        %v783 = vunpack.c.l.b16 %v450
        %v784 = vunpack.c.h.b16 %v450
        %v785 = vunpack.c.l.b16 %v451
        %v786 = vunpack.c.h.b16 %v451
        %v787 = vunpack.c.l.b16 %v452
        %v788 = vunpack.c.h.b16 %v452
        %v789 = vunpack.c.l.b16 %v453
        %v790 = vunpack.c.h.b16 %v453
        %v791 = vunpack.c.l.b16 %v454
        %v792 = vunpack.c.h.b16 %v454
        %v793 = vunpack.c.l.b16 %v455
        %v794 = vunpack.c.h.b16 %v455
        %v795 = vunpack.c.l.b16 %v456
        %v796 = vunpack.c.h.b16 %v456
        %v797 = vunpack.c.l.b16 %v457
        %v798 = vunpack.c.h.b16 %v457
        %v799 = vunpack.c.l.b16 %v458
        %v800 = vunpack.c.h.b16 %v458
        %v801 = vunpack.c.l.b16 %v459
        %v802 = vunpack.c.h.b16 %v459
        %v803 = vunpack.c.l.b16 %v460
        %v804 = vunpack.c.h.b16 %v460
        %v805 = vunpack.c.l.b16 %v461
        %v806 = vunpack.c.h.b16 %v461
        %v807 = vunpack.c.l.b16 %v462
        %v808 = vunpack.c.h.b16 %v462
        %v809 = vunpack.c.l.b16 %v463
        %v810 = vunpack.c.h.b16 %v463
        %v811 = vunpack.c.l.b16 %v464
        %v812 = vunpack.c.h.b16 %v464
        %v813 = vunpack.c.l.b16 %v465
        %v814 = vunpack.c.h.b16 %v465
        %v815 = vunpack.c.l.b16 %v466
        %v816 = vunpack.c.h.b16 %v466
        %v817 = vunpack.c.l.b16 %v467
        %v818 = vunpack.c.h.b16 %v467
        %v819 = vunpack.c.l.b16 %v468
        %v820 = vunpack.c.h.b16 %v468
        %v821 = vunpack.c.l.b16 %v469
        %v822 = vunpack.c.h.b16 %v469
        %v823 = vunpack.c.l.b16 %v470
        %v824 = vunpack.c.h.b16 %v470
        %v825 = vunpack.c.l.b16 %v471
        %v826 = vunpack.c.h.b16 %v471
        %v827 = vunpack.c.l.b16 %v472
        %v828 = vunpack.c.h.b16 %v472
        %v829 = vunpack.c.l.b16 %v473
        %v830 = vunpack.c.h.b16 %v473
        %v831 = vunpack.c.l.b16 %v474
        %v832 = vunpack.c.h.b16 %v474
        %v833 = vunpack.c.l.b16 %v475
        %v834 = vunpack.c.h.b16 %v475
        %v835 = vunpack.c.l.b16 %v476
        %v836 = vunpack.c.h.b16 %v476
        %v837 = vunpack.c.l.b16 %v477
        %v838 = vunpack.c.h.b16 %v477
        %v839 = vunpack.c.l.b16 %v478
        %v840 = vunpack.c.h.b16 %v478
        %v841 = vunpack.c.l.b16 %v479
        %v842 = vunpack.c.h.b16 %v479
        %v843 = vunpack.c.l.b16 %v480
        %v844 = vunpack.c.h.b16 %v480
        %v845 = vunpack.c.l.b16 %v481
        %v846 = vunpack.c.h.b16 %v481
        %v847 = vunpack.c.l.b16 %v482
        %v848 = vunpack.c.h.b16 %v482
        %v849 = vunpack.c.l.b16 %v483
        %v850 = vunpack.c.h.b16 %v483
        %v851 = vunpack.c.l.b16 %v484
        %v852 = vunpack.c.h.b16 %v484
        %v853 = vunpack.c.l.b16 %v485
        %v854 = vunpack.c.h.b16 %v485
        %v855 = vunpack.c.l.b16 %v486
        %v856 = vunpack.c.h.b16 %v486
        %v857 = vunpack.c.l.b16 %v487
        %v858 = vunpack.c.h.b16 %v487
        %v859 = vunpack.c.l.b16 %v488
        %v860 = vunpack.c.h.b16 %v488
        %v861 = vunpack.c.l.b16 %v489
        %v862 = vunpack.c.h.b16 %v489
        %v863 = vunpack.c.l.b16 %v490
        %v864 = vunpack.c.h.b16 %v490
        %v865 = vunpack.c.l.b16 %v491
        %v866 = vunpack.c.h.b16 %v491
        %v867 = vunpack.c.l.b16 %v492
        %v868 = vunpack.c.h.b16 %v492
        %v869 = vunpack.c.l.b16 %v493
        %v870 = vunpack.c.h.b16 %v493
        %v871 = vunpack.c.l.b16 %v494
        %v872 = vunpack.c.h.b16 %v494
        %v873 = vunpack.c.l.b16 %v495
        %v874 = vunpack.c.h.b16 %v495
        %v875 = vunpack.c.l.b16 %v496
        %v876 = vunpack.c.h.b16 %v496
        %v877 = vunpack.c.l.b16 %v497
        %v878 = vunpack.c.h.b16 %v497
        %v879 = vunpack.c.l.b16 %v498
        %v880 = vunpack.c.h.b16 %v498
        %v881 = vunpack.c.l.b16 %v499
        %v882 = vunpack.c.h.b16 %v499
        %v883 = vunpack.c.l.b16 %v500
        %v884 = vunpack.c.h.b16 %v500
        %v885 = vunpack.c.l.b16 %v501
        %v886 = vunpack.c.h.b16 %v501
        %v887 = vunpack.c.l.b16 %v502
        %v888 = vunpack.c.h.b16 %v502
        %v889 = vunpack.c.l.b16 %v503
        %v890 = vunpack.c.h.b16 %v503
        %v891 = vunpack.c.l.b16 %v504
        %v892 = vunpack.c.h.b16 %v504
        %v893 = vunpack.c.l.b16 %v505
        %v894 = vunpack.c.h.b16 %v505
        %v895 = vunpack.c.l.b16 %v506
        %v896 = vunpack.c.h.b16 %v506
        %v897 = vunpack.c.l.b16 %v507
        %v898 = vunpack.c.h.b16 %v507
        %v899 = vunpack.c.l.b16 %v508
        %v900 = vunpack.c.h.b16 %v508
        %v901 = vunpack.c.l.b16 %v509
        %v902 = vunpack.c.h.b16 %v509
        %v903 = vunpack.c.l.b16 %v510
        %v904 = vunpack.c.h.b16 %v510
        %v905 = vunpack.c.l.b16 %v511
        %v906 = vunpack.c.h.b16 %v511
        %v907 = vunpack.c.l.b16 %v512
        %v908 = vunpack.c.h.b16 %v512
        %v909 = vunpack.c.l.b16 %v513
        %v910 = vunpack.c.h.b16 %v513
        %v911 = vunpack.c.l.b16 %v514
        %v912 = vunpack.c.h.b16 %v514
        %v913 = vpack.c.b16 %v661, %v657
        %v914 = vpack.c.b16 %v662, %v658
        %v915 = vpack.c.b16 %v663, %v659
        %v916 = vpack.c.b16 %v664, %v660
        %v917 = vpack.c.b16 %v669, %v665
        %v918 = vpack.c.b16 %v670, %v666
        %v919 = vpack.c.b16 %v671, %v667
        %v920 = vpack.c.b16 %v672, %v668
        %v921 = vpack.c.b16 %v677, %v673
        %v922 = vpack.c.b16 %v678, %v674
        %v923 = vpack.c.b16 %v679, %v675
        %v924 = vpack.c.b16 %v680, %v676
        %v925 = vpack.c.b16 %v685, %v681
        %v926 = vpack.c.b16 %v686, %v682
        %v927 = vpack.c.b16 %v687, %v683
        %v928 = vpack.c.b16 %v688, %v684
        %v929 = vpack.c.b16 %v693, %v689
        %v930 = vpack.c.b16 %v694, %v690
        %v931 = vpack.c.b16 %v695, %v691
        %v932 = vpack.c.b16 %v696, %v692
        %v933 = vpack.c.b16 %v701, %v697
        %v934 = vpack.c.b16 %v702, %v698
        %v935 = vpack.c.b16 %v703, %v699
        %v936 = vpack.c.b16 %v704, %v700
        %v937 = vpack.c.b16 %v709, %v705
        %v938 = vpack.c.b16 %v710, %v706
        %v939 = vpack.c.b16 %v711, %v707
        %v940 = vpack.c.b16 %v712, %v708
        %v941 = vpack.c.b16 %v717, %v713
        %v942 = vpack.c.b16 %v718, %v714
        %v943 = vpack.c.b16 %v719, %v715
        %v944 = vpack.c.b16 %v720, %v716
        %v945 = vpack.c.b16 %v725, %v721
        %v946 = vpack.c.b16 %v726, %v722
        %v947 = vpack.c.b16 %v727, %v723
        %v948 = vpack.c.b16 %v728, %v724
        %v949 = vpack.c.b16 %v733, %v729
        %v950 = vpack.c.b16 %v734, %v730
        %v951 = vpack.c.b16 %v735, %v731
        %v952 = vpack.c.b16 %v736, %v732
        %v953 = vpack.c.b16 %v741, %v737
        %v954 = vpack.c.b16 %v742, %v738
        %v955 = vpack.c.b16 %v743, %v739
        %v956 = vpack.c.b16 %v744, %v740
        %v957 = vpack.c.b16 %v749, %v745
        %v958 = vpack.c.b16 %v750, %v746
        %v959 = vpack.c.b16 %v751, %v747
        %v960 = vpack.c.b16 %v752, %v748
        %v961 = vpack.c.b16 %v757, %v753
        %v962 = vpack.c.b16 %v758, %v754
        %v963 = vpack.c.b16 %v759, %v755
        %v964 = vpack.c.b16 %v760, %v756
        %v965 = vpack.c.b16 %v765, %v761
        %v966 = vpack.c.b16 %v766, %v762
        %v967 = vpack.c.b16 %v767, %v763
        %v968 = vpack.c.b16 %v768, %v764
        %v969 = vpack.c.b16 %v773, %v769
        %v970 = vpack.c.b16 %v774, %v770
        %v971 = vpack.c.b16 %v775, %v771
        %v972 = vpack.c.b16 %v776, %v772
        %v973 = vpack.c.b16 %v781, %v777
        %v974 = vpack.c.b16 %v782, %v778
        %v975 = vpack.c.b16 %v783, %v779
        %v976 = vpack.c.b16 %v784, %v780
        %v977 = vpack.c.b16 %v789, %v785
        %v978 = vpack.c.b16 %v790, %v786
        %v979 = vpack.c.b16 %v791, %v787
        %v980 = vpack.c.b16 %v792, %v788
        %v981 = vpack.c.b16 %v797, %v793
        %v982 = vpack.c.b16 %v798, %v794
        %v983 = vpack.c.b16 %v799, %v795
        %v984 = vpack.c.b16 %v800, %v796
        %v985 = vpack.c.b16 %v805, %v801
        %v986 = vpack.c.b16 %v806, %v802
        %v987 = vpack.c.b16 %v807, %v803
        %v988 = vpack.c.b16 %v808, %v804
        %v989 = vpack.c.b16 %v813, %v809
        %v990 = vpack.c.b16 %v814, %v810
        %v991 = vpack.c.b16 %v815, %v811
        %v992 = vpack.c.b16 %v816, %v812
        %v993 = vpack.c.b16 %v821, %v817
        %v994 = vpack.c.b16 %v822, %v818
        %v995 = vpack.c.b16 %v823, %v819
        %v996 = vpack.c.b16 %v824, %v820
        %v997 = vpack.c.b16 %v829, %v825
        %v998 = vpack.c.b16 %v830, %v826
        %v999 = vpack.c.b16 %v831, %v827
        %v1000 = vpack.c.b16 %v832, %v828
        %v1001 = vpack.c.b16 %v837, %v833
        %v1002 = vpack.c.b16 %v838, %v834
        %v1003 = vpack.c.b16 %v839, %v835
        %v1004 = vpack.c.b16 %v840, %v836
        %v1005 = vpack.c.b16 %v845, %v841
        %v1006 = vpack.c.b16 %v846, %v842
        %v1007 = vpack.c.b16 %v847, %v843
        %v1008 = vpack.c.b16 %v848, %v844
        %v1009 = vpack.c.b16 %v853, %v849
        %v1010 = vpack.c.b16 %v854, %v850
        %v1011 = vpack.c.b16 %v855, %v851
        %v1012 = vpack.c.b16 %v856, %v852
        %v1013 = vpack.c.b16 %v861, %v857
        %v1014 = vpack.c.b16 %v862, %v858
        %v1015 = vpack.c.b16 %v863, %v859
        %v1016 = vpack.c.b16 %v864, %v860
        %v1017 = vpack.c.b16 %v869, %v865
        %v1018 = vpack.c.b16 %v870, %v866
        %v1019 = vpack.c.b16 %v871, %v867
        %v1020 = vpack.c.b16 %v872, %v868
        %v1021 = vpack.c.b16 %v877, %v873
        %v1022 = vpack.c.b16 %v878, %v874
        %v1023 = vpack.c.b16 %v879, %v875
        %v1024 = vpack.c.b16 %v880, %v876
        %v1025 = vpack.c.b16 %v885, %v881
        %v1026 = vpack.c.b16 %v886, %v882
        %v1027 = vpack.c.b16 %v887, %v883
        %v1028 = vpack.c.b16 %v888, %v884
        %v1029 = vpack.c.b16 %v893, %v889
        %v1030 = vpack.c.b16 %v894, %v890
        %v1031 = vpack.c.b16 %v895, %v891
        %v1032 = vpack.c.b16 %v896, %v892
        %v1033 = vpack.c.b16 %v901, %v897
        %v1034 = vpack.c.b16 %v902, %v898
        %v1035 = vpack.c.b16 %v903, %v899
        %v1036 = vpack.c.b16 %v904, %v900
        %v1037 = vpack.c.b16 %v909, %v905
        %v1038 = vpack.c.b16 %v910, %v906
        %v1039 = vpack.c.b16 %v911, %v907
        %v1040 = vpack.c.b16 %v912, %v908
        %1169 = vmatprep.subr.bf16.mxu0 %v914
        %1170 = vmatpush1.bf16.msra.mxu0 %v913
        %1171 = vmatprep.subr.bf16.mxu0 %v918
        %1172 = vmatpush1.bf16.msra.mxu0 %v917
        %1173 = vmatprep.subr.bf16.mxu0 %v922
        %1174 = vmatpush1.bf16.msra.mxu0 %v921
        %1175 = vmatprep.subr.bf16.mxu0 %v926
        %1176 = vmatpush1.bf16.msra.mxu0 %v925
        %1177 = vmatprep.subr.bf16.mxu0 %v930
        %1178 = vmatpush1.bf16.msra.mxu0 %v929
        %1179 = vmatprep.subr.bf16.mxu0 %v934
        %1180 = vmatpush1.bf16.msra.mxu0 %v933
        %1181 = vmatprep.subr.bf16.mxu0 %v938
        %1182 = vmatpush1.bf16.msra.mxu0 %v937
        %1183 = vmatprep.subr.bf16.mxu0 %v942
        %1184 = vmatpush1.bf16.msra.mxu0 %v941
        %1185 = vmatprep.subr.bf16.mxu0 %v946
        %1186 = vmatpush1.bf16.msra.mxu0 %v945
        %1187 = vmatprep.subr.bf16.mxu0 %v950
        %1188 = vmatpush1.bf16.msra.mxu0 %v949
        %1189 = vmatprep.subr.bf16.mxu0 %v954
        %1190 = vmatpush1.bf16.msra.mxu0 %v953
        %1191 = vmatprep.subr.bf16.mxu0 %v958
        %1192 = vmatpush1.bf16.msra.mxu0 %v957
        %1193 = vmatprep.subr.bf16.mxu0 %v962
        %1194 = vmatpush1.bf16.msra.mxu0 %v961
        %1195 = vmatprep.subr.bf16.mxu0 %v966
        %1196 = vmatpush1.bf16.msra.mxu0 %v965
        %1197 = vmatprep.subr.bf16.mxu0 %v970
        %1198 = vmatpush1.bf16.msra.mxu0 %v969
        %1199 = vmatprep.subr.bf16.mxu0 %v974
        %1200 = vmatpush1.bf16.msra.mxu0 %v973
        %1201 = vmatprep.mubr.bf16.mxu0 %v522
        %1202 = vmatmul.mubr.bf16.gmra.mrb[0].mxu0 %v521
        %v1203 = vpop.f32.mrb[0].mxu0
        %v1204 = vadd.f32 0.0, %v1203
        %v1205 = vpop.f32.mrb[0].mxu0
        %v1206 = vadd.f32 0.0, %v1205
        %v1207 = vpop.f32.mrb[0].mxu0
        %v1208 = vpop.f32.mrb[0].mxu0
        %1209 = vdwg.mxu0
        %1210 = vmatprep.subr.bf16.mxu0 %v978
        %1211 = vmatpush1.bf16.msra.mxu0 %v977
        %1212 = vmatprep.subr.bf16.mxu0 %v982
        %1213 = vmatpush1.bf16.msra.mxu0 %v981
        %1214 = vmatprep.subr.bf16.mxu0 %v986
        %1215 = vmatpush1.bf16.msra.mxu0 %v985
        %1216 = vmatprep.subr.bf16.mxu0 %v990
        %1217 = vmatpush1.bf16.msra.mxu0 %v989
        %1218 = vmatprep.subr.bf16.mxu0 %v994
        %1219 = vmatpush1.bf16.msra.mxu0 %v993
        %1220 = vmatprep.subr.bf16.mxu0 %v998
        %1221 = vmatpush1.bf16.msra.mxu0 %v997
        %1222 = vmatprep.subr.bf16.mxu0 %v1002
        %1223 = vmatpush1.bf16.msra.mxu0 %v1001
        %1224 = vmatprep.subr.bf16.mxu0 %v1006
        %1225 = vmatpush1.bf16.msra.mxu0 %v1005
        %1226 = vmatprep.subr.bf16.mxu0 %v1010
        %1227 = vmatpush1.bf16.msra.mxu0 %v1009
        %1228 = vmatprep.subr.bf16.mxu0 %v1014
        %1229 = vmatpush1.bf16.msra.mxu0 %v1013
        %1230 = vmatprep.subr.bf16.mxu0 %v1018
        %1231 = vmatpush1.bf16.msra.mxu0 %v1017
        %1232 = vmatprep.subr.bf16.mxu0 %v1022
        %1233 = vmatpush1.bf16.msra.mxu0 %v1021
        %1234 = vmatprep.subr.bf16.mxu0 %v1026
        %1235 = vmatpush1.bf16.msra.mxu0 %v1025
        %1236 = vmatprep.subr.bf16.mxu0 %v1030
        %1237 = vmatpush1.bf16.msra.mxu0 %v1029
        %1238 = vmatprep.subr.bf16.mxu0 %v1034
        %1239 = vmatpush1.bf16.msra.mxu0 %v1033
        %1240 = vmatprep.subr.bf16.mxu0 %v1038
        %1241 = vmatpush1.bf16.msra.mxu0 %v1037
        %1242 = vmatprep.mubr.bf16.mxu0 %v524
        %1243 = vmatmul.mubr.bf16.gmra.mrb[0].mxu0 %v523
        %v1244 = vpop.f32.mrb[0].mxu0
        %v1245 = vadd.f32 %v1204, %v1244
        %v1246 = vpop.f32.mrb[0].mxu0
        %v1247 = vadd.f32 %v1206, %v1246
        %v1248 = vpop.f32.mrb[0].mxu0
        %v1249 = vpop.f32.mrb[0].mxu0
        %1250 = vdwg.mxu0
        %1251 = vmatprep.subr.bf16.mxu0 %v916
        %1252 = vmatpush1.bf16.msra.mxu0 %v915
        %1253 = vmatprep.subr.bf16.mxu0 %v920
        %1254 = vmatpush1.bf16.msra.mxu0 %v919
        %1255 = vmatprep.subr.bf16.mxu0 %v924
        %1256 = vmatpush1.bf16.msra.mxu0 %v923
        %1257 = vmatprep.subr.bf16.mxu0 %v928
        %1258 = vmatpush1.bf16.msra.mxu0 %v927
        %1259 = vmatprep.subr.bf16.mxu0 %v932
        %1260 = vmatpush1.bf16.msra.mxu0 %v931
        %1261 = vmatprep.subr.bf16.mxu0 %v936
        %1262 = vmatpush1.bf16.msra.mxu0 %v935
        %1263 = vmatprep.subr.bf16.mxu0 %v940
        %1264 = vmatpush1.bf16.msra.mxu0 %v939
        %1265 = vmatprep.subr.bf16.mxu0 %v944
        %1266 = vmatpush1.bf16.msra.mxu0 %v943
        %1267 = vmatprep.subr.bf16.mxu0 %v948
        %1268 = vmatpush1.bf16.msra.mxu0 %v947
        %1269 = vmatprep.subr.bf16.mxu0 %v952
        %1270 = vmatpush1.bf16.msra.mxu0 %v951
        %1271 = vmatprep.subr.bf16.mxu0 %v956
        %1272 = vmatpush1.bf16.msra.mxu0 %v955
        %1273 = vmatprep.subr.bf16.mxu0 %v960
        %1274 = vmatpush1.bf16.msra.mxu0 %v959
        %1275 = vmatprep.subr.bf16.mxu0 %v964
        %1276 = vmatpush1.bf16.msra.mxu0 %v963
        %1277 = vmatprep.subr.bf16.mxu0 %v968
        %1278 = vmatpush1.bf16.msra.mxu0 %v967
        %1279 = vmatprep.subr.bf16.mxu0 %v972
        %1280 = vmatpush1.bf16.msra.mxu0 %v971
        %1281 = vmatprep.subr.bf16.mxu0 %v976
        %1282 = vmatpush1.bf16.msra.mxu0 %v975
        %1283 = vmatprep.mubr.bf16.mxu0 %v522
        %1284 = vmatmul.mubr.bf16.gmra.mrb[0].mxu0 %v521
        %v1285 = vpop.f32.mrb[0].mxu0
        %v1286 = vadd.f32 0.0, %v1285
        %v1287 = vpop.f32.mrb[0].mxu0
        %v1288 = vadd.f32 0.0, %v1287
        %v1289 = vpop.f32.mrb[0].mxu0
        %v1290 = vpop.f32.mrb[0].mxu0
        %1291 = vdwg.mxu0
        %1292 = vmatprep.subr.bf16.mxu0 %v980
        %1293 = vmatpush1.bf16.msra.mxu0 %v979
        %1294 = vmatprep.subr.bf16.mxu0 %v984
        %1295 = vmatpush1.bf16.msra.mxu0 %v983
        %1296 = vmatprep.subr.bf16.mxu0 %v988
        %1297 = vmatpush1.bf16.msra.mxu0 %v987
        %1298 = vmatprep.subr.bf16.mxu0 %v992
        %1299 = vmatpush1.bf16.msra.mxu0 %v991
        %1300 = vmatprep.subr.bf16.mxu0 %v996
        %1301 = vmatpush1.bf16.msra.mxu0 %v995
        %1302 = vmatprep.subr.bf16.mxu0 %v1000
        %1303 = vmatpush1.bf16.msra.mxu0 %v999
        %1304 = vmatprep.subr.bf16.mxu0 %v1004
        %1305 = vmatpush1.bf16.msra.mxu0 %v1003
        %1306 = vmatprep.subr.bf16.mxu0 %v1008
        %1307 = vmatpush1.bf16.msra.mxu0 %v1007
        %1308 = vmatprep.subr.bf16.mxu0 %v1012
        %1309 = vmatpush1.bf16.msra.mxu0 %v1011
        %1310 = vmatprep.subr.bf16.mxu0 %v1016
        %1311 = vmatpush1.bf16.msra.mxu0 %v1015
        %1312 = vmatprep.subr.bf16.mxu0 %v1020
        %1313 = vmatpush1.bf16.msra.mxu0 %v1019
        %1314 = vmatprep.subr.bf16.mxu0 %v1024
        %1315 = vmatpush1.bf16.msra.mxu0 %v1023
        %1316 = vmatprep.subr.bf16.mxu0 %v1028
        %1317 = vmatpush1.bf16.msra.mxu0 %v1027
        %1318 = vmatprep.subr.bf16.mxu0 %v1032
        %1319 = vmatpush1.bf16.msra.mxu0 %v1031
        %1320 = vmatprep.subr.bf16.mxu0 %v1036
        %1321 = vmatpush1.bf16.msra.mxu0 %v1035
        %1322 = vmatprep.subr.bf16.mxu0 %v1040
        %1323 = vmatpush1.bf16.msra.mxu0 %v1039
        %1324 = vmatprep.mubr.bf16.mxu0 %v524
        %1325 = vmatmul.mubr.bf16.gmra.mrb[0].mxu0 %v523
        %v1326 = vpop.f32.mrb[0].mxu0
        %v1327 = vadd.f32 %v1286, %v1326
        %v1328 = vpop.f32.mrb[0].mxu0
        %v1329 = vadd.f32 %v1288, %v1328
        %v1330 = vpop.f32.mrb[0].mxu0
        %v1331 = vpop.f32.mrb[0].mxu0
        %1332 = vdwg.mxu0
        %v1333 = vadd.f32 %v381, %v1245
        %v1334 = vadd.f32 %v382, %v1247
        %v1335 = vadd.f32 %v383, %v1327
        %v1336 = vadd.f32 %v384, %v1329
        %1337 = vst [vmem:[#allocation2] sm:$0xff] %v1333
        %1338 = vst [vmem:[#allocation2 + $0x8] sm:$0xff] %v1334
        %1339 = vst [vmem:[#allocation2 + $0x10] sm:$0xff] %v1335
        %1340 = vst [vmem:[#allocation2 + $0x18] sm:$0xff] %v1336
        %p1341 = scmp.eq.s32.totalorder %s24, 1
        // Predicated region
        $region61: #{_forward.1} parent=55 // pred_check
          %p1342 = pneg %p1341
        $region62: #{_forward.1} parent=55 // pred_check_branch
          %1344 = sbr.rel (%p1342) target = $region64
        $region63: #{_forward.1} parent=55 // pred_region
          %v1345 = vld [vmem:[#allocation2] sm:$0xff]
          %v1346 = vld [vmem:[#allocation2 + $0x8] sm:$0xff]
          %v1347 = vld [vmem:[#allocation2 + $0x10] sm:$0xff]
          %v1348 = vld [vmem:[#allocation2 + $0x18] sm:$0xff]
          %v1349 = vld [vmem:[%s2] sm:$0xf]
          %v1351 = vlaneseq
          %v1352 = vshrl.u32 %v1351, 7
          %v1353 = vsub.s32 0, %v1352
          %v1354 = vrot.slane %v1349, %v1353
          %v1355 = vlaneseq
          %v1356 = vshrl.u32 %v1355, 7
          %v1357 = vsub.s32 1, %v1356
          %v1358 = vrot.slane %v1349, %v1357
          %v1359 = vlaneseq
          %v1360 = vshrl.u32 %v1359, 7
          %v1361 = vsub.s32 2, %v1360
          %v1362 = vrot.slane %v1349, %v1361
          %v1363 = vlaneseq
          %v1364 = vshrl.u32 %v1363, 7
          %v1365 = vsub.s32 3, %v1364
          %v1366 = vrot.slane %v1349, %v1365
          %v1371 = vadd.f32 %v1345, %v1354
          %v1372 = vadd.f32 %v1346, %v1358
          %v1373 = vadd.f32 %v1347, %v1362
          %v1374 = vadd.f32 %v1348, %v1366
          %v1375 = vpack.c.bf16 %v1371, %v1371
          %v1376 = vpack.c.bf16 %v1372, %v1372
          %v1377 = vpack.c.bf16 %v1373, %v1373
          %v1378 = vpack.c.bf16 %v1374, %v1374
          %v1379 = vld [vmem:[%s3] sm:$0xf]
          %v1380 = vld [vmem:[%s3 + $0x4] sm:$0xf]
          %v1381 = vld [vmem:[%s3 + $0x8] sm:$0xf]
          %v1382 = vld [vmem:[%s3 + $0xc] sm:$0xf]
          %v1383 = vld [vmem:[%s3 + $0x10] sm:$0xf]
          %v1384 = vld [vmem:[%s3 + $0x14] sm:$0xf]
          %v1385 = vld [vmem:[%s3 + $0x18] sm:$0xf]
          %v1386 = vld [vmem:[%s3 + $0x1c] sm:$0xf]
          %v1387 = vld [vmem:[%s3 + $0x20] sm:$0xf]
          %v1388 = vld [vmem:[%s3 + $0x24] sm:$0xf]
          %v1389 = vld [vmem:[%s3 + $0x28] sm:$0xf]
          %v1390 = vld [vmem:[%s3 + $0x2c] sm:$0xf]
          %v1391 = vld [vmem:[%s3 + $0x30] sm:$0xf]
          %v1392 = vld [vmem:[%s3 + $0x34] sm:$0xf]
          %v1393 = vld [vmem:[%s3 + $0x38] sm:$0xf]
          %v1394 = vld [vmem:[%s3 + $0x3c] sm:$0xf]
          %v1395 = vld [vmem:[%s3 + $0x40] sm:$0xf]
          %v1396 = vld [vmem:[%s3 + $0x44] sm:$0xf]
          %v1397 = vld [vmem:[%s3 + $0x48] sm:$0xf]
          %v1398 = vld [vmem:[%s3 + $0x4c] sm:$0xf]
          %v1399 = vld [vmem:[%s3 + $0x50] sm:$0xf]
          %v1400 = vld [vmem:[%s3 + $0x54] sm:$0xf]
          %v1401 = vld [vmem:[%s3 + $0x58] sm:$0xf]
          %v1402 = vld [vmem:[%s3 + $0x5c] sm:$0xf]
          %v1403 = vld [vmem:[%s3 + $0x60] sm:$0xf]
          %v1404 = vld [vmem:[%s3 + $0x64] sm:$0xf]
          %v1405 = vld [vmem:[%s3 + $0x68] sm:$0xf]
          %v1406 = vld [vmem:[%s3 + $0x6c] sm:$0xf]
          %v1407 = vld [vmem:[%s3 + $0x70] sm:$0xf]
          %v1408 = vld [vmem:[%s3 + $0x74] sm:$0xf]
          %v1409 = vld [vmem:[%s3 + $0x78] sm:$0xf]
          %v1410 = vld [vmem:[%s3 + $0x7c] sm:$0xf]
          %v1411 = vld [vmem:[%s3 + $0x80] sm:$0xf]
          %v1412 = vld [vmem:[%s3 + $0x84] sm:$0xf]
          %v1413 = vld [vmem:[%s3 + $0x88] sm:$0xf]
          %v1414 = vld [vmem:[%s3 + $0x8c] sm:$0xf]
          %v1415 = vld [vmem:[%s3 + $0x90] sm:$0xf]
          %v1416 = vld [vmem:[%s3 + $0x94] sm:$0xf]
          %v1417 = vld [vmem:[%s3 + $0x98] sm:$0xf]
          %v1418 = vld [vmem:[%s3 + $0x9c] sm:$0xf]
          %v1419 = vld [vmem:[%s3 + $0xa0] sm:$0xf]
          %v1420 = vld [vmem:[%s3 + $0xa4] sm:$0xf]
          %v1421 = vld [vmem:[%s3 + $0xa8] sm:$0xf]
          %v1422 = vld [vmem:[%s3 + $0xac] sm:$0xf]
          %v1423 = vld [vmem:[%s3 + $0xb0] sm:$0xf]
          %v1424 = vld [vmem:[%s3 + $0xb4] sm:$0xf]
          %v1425 = vld [vmem:[%s3 + $0xb8] sm:$0xf]
          %v1426 = vld [vmem:[%s3 + $0xbc] sm:$0xf]
          %v1427 = vld [vmem:[%s3 + $0xc0] sm:$0xf]
          %v1428 = vld [vmem:[%s3 + $0xc4] sm:$0xf]
          %v1429 = vld [vmem:[%s3 + $0xc8] sm:$0xf]
          %v1430 = vld [vmem:[%s3 + $0xcc] sm:$0xf]
          %v1431 = vld [vmem:[%s3 + $0xd0] sm:$0xf]
          %v1432 = vld [vmem:[%s3 + $0xd4] sm:$0xf]
          %v1433 = vld [vmem:[%s3 + $0xd8] sm:$0xf]
          %v1434 = vld [vmem:[%s3 + $0xdc] sm:$0xf]
          %v1435 = vld [vmem:[%s3 + $0xe0] sm:$0xf]
          %v1436 = vld [vmem:[%s3 + $0xe4] sm:$0xf]
          %v1437 = vld [vmem:[%s3 + $0xe8] sm:$0xf]
          %v1438 = vld [vmem:[%s3 + $0xec] sm:$0xf]
          %v1439 = vld [vmem:[%s3 + $0xf0] sm:$0xf]
          %v1440 = vld [vmem:[%s3 + $0xf4] sm:$0xf]
          %v1441 = vld [vmem:[%s3 + $0xf8] sm:$0xf]
          %v1442 = vld [vmem:[%s3 + $0xfc] sm:$0xf]
          %v1443 = vld [vmem:[%s4] sm:$0x1]
          %v1445 = vlaneseq
          %v1446 = vshrl.u32 %v1445, 7
          %v1447 = vsub.s32 0, %v1446
          %v1448 = vrot.slane %v1443, %v1447
          %v1514 = vunpack.c.l.b16 %v1379
          %v1515 = vunpack.c.l.b16 %v1380
          %v1516 = vunpack.c.l.b16 %v1381
          %v1517 = vunpack.c.l.b16 %v1382
          %v1518 = vunpack.c.l.b16 %v1383
          %v1519 = vunpack.c.l.b16 %v1384
          %v1520 = vunpack.c.l.b16 %v1385
          %v1521 = vunpack.c.l.b16 %v1386
          %v1522 = vunpack.c.l.b16 %v1387
          %v1523 = vunpack.c.l.b16 %v1388
          %v1524 = vunpack.c.l.b16 %v1389
          %v1525 = vunpack.c.l.b16 %v1390
          %v1526 = vunpack.c.l.b16 %v1391
          %v1527 = vunpack.c.l.b16 %v1392
          %v1528 = vunpack.c.l.b16 %v1393
          %v1529 = vunpack.c.l.b16 %v1394
          %v1530 = vunpack.c.l.b16 %v1395
          %v1531 = vunpack.c.l.b16 %v1396
          %v1532 = vunpack.c.l.b16 %v1397
          %v1533 = vunpack.c.l.b16 %v1398
          %v1534 = vunpack.c.l.b16 %v1399
          %v1535 = vunpack.c.l.b16 %v1400
          %v1536 = vunpack.c.l.b16 %v1401
          %v1537 = vunpack.c.l.b16 %v1402
          %v1538 = vunpack.c.l.b16 %v1403
          %v1539 = vunpack.c.l.b16 %v1404
          %v1540 = vunpack.c.l.b16 %v1405
          %v1541 = vunpack.c.l.b16 %v1406
          %v1542 = vunpack.c.l.b16 %v1407
          %v1543 = vunpack.c.l.b16 %v1408
          %v1544 = vunpack.c.l.b16 %v1409
          %v1545 = vunpack.c.l.b16 %v1410
          %v1546 = vunpack.c.l.b16 %v1411
          %v1547 = vunpack.c.l.b16 %v1412
          %v1548 = vunpack.c.l.b16 %v1413
          %v1549 = vunpack.c.l.b16 %v1414
          %v1550 = vunpack.c.l.b16 %v1415
          %v1551 = vunpack.c.l.b16 %v1416
          %v1552 = vunpack.c.l.b16 %v1417
          %v1553 = vunpack.c.l.b16 %v1418
          %v1554 = vunpack.c.l.b16 %v1419
          %v1555 = vunpack.c.l.b16 %v1420
          %v1556 = vunpack.c.l.b16 %v1421
          %v1557 = vunpack.c.l.b16 %v1422
          %v1558 = vunpack.c.l.b16 %v1423
          %v1559 = vunpack.c.l.b16 %v1424
          %v1560 = vunpack.c.l.b16 %v1425
          %v1561 = vunpack.c.l.b16 %v1426
          %v1562 = vunpack.c.l.b16 %v1427
          %v1563 = vunpack.c.l.b16 %v1428
          %v1564 = vunpack.c.l.b16 %v1429
          %v1565 = vunpack.c.l.b16 %v1430
          %v1566 = vunpack.c.l.b16 %v1431
          %v1567 = vunpack.c.l.b16 %v1432
          %v1568 = vunpack.c.l.b16 %v1433
          %v1569 = vunpack.c.l.b16 %v1434
          %v1570 = vunpack.c.l.b16 %v1435
          %v1571 = vunpack.c.l.b16 %v1436
          %v1572 = vunpack.c.l.b16 %v1437
          %v1573 = vunpack.c.l.b16 %v1438
          %v1574 = vunpack.c.l.b16 %v1439
          %v1575 = vunpack.c.l.b16 %v1440
          %v1576 = vunpack.c.l.b16 %v1441
          %v1577 = vunpack.c.l.b16 %v1442
          %v1578 = vpack.c.b16 %v1515, %v1514
          %v1579 = vpack.c.b16 %v1517, %v1516
          %v1580 = vpack.c.b16 %v1519, %v1518
          %v1581 = vpack.c.b16 %v1521, %v1520
          %v1582 = vpack.c.b16 %v1523, %v1522
          %v1583 = vpack.c.b16 %v1525, %v1524
          %v1584 = vpack.c.b16 %v1527, %v1526
          %v1585 = vpack.c.b16 %v1529, %v1528
          %v1586 = vpack.c.b16 %v1531, %v1530
          %v1587 = vpack.c.b16 %v1533, %v1532
          %v1588 = vpack.c.b16 %v1535, %v1534
          %v1589 = vpack.c.b16 %v1537, %v1536
          %v1590 = vpack.c.b16 %v1539, %v1538
          %v1591 = vpack.c.b16 %v1541, %v1540
          %v1592 = vpack.c.b16 %v1543, %v1542
          %v1593 = vpack.c.b16 %v1545, %v1544
          %v1594 = vpack.c.b16 %v1547, %v1546
          %v1595 = vpack.c.b16 %v1549, %v1548
          %v1596 = vpack.c.b16 %v1551, %v1550
          %v1597 = vpack.c.b16 %v1553, %v1552
          %v1598 = vpack.c.b16 %v1555, %v1554
          %v1599 = vpack.c.b16 %v1557, %v1556
          %v1600 = vpack.c.b16 %v1559, %v1558
          %v1601 = vpack.c.b16 %v1561, %v1560
          %v1602 = vpack.c.b16 %v1563, %v1562
          %v1603 = vpack.c.b16 %v1565, %v1564
          %v1604 = vpack.c.b16 %v1567, %v1566
          %v1605 = vpack.c.b16 %v1569, %v1568
          %v1606 = vpack.c.b16 %v1571, %v1570
          %v1607 = vpack.c.b16 %v1573, %v1572
          %v1608 = vpack.c.b16 %v1575, %v1574
          %v1609 = vpack.c.b16 %v1577, %v1576
          %1642 = vmatprep.subr.bf16.mxu0 0
          %1643 = vmatpush1.bf16.msra.mxu0 %v1578
          %1644 = vmatprep.subr.bf16.mxu0 0
          %1645 = vmatpush1.bf16.msra.mxu0 %v1579
          %1646 = vmatprep.subr.bf16.mxu0 0
          %1647 = vmatpush1.bf16.msra.mxu0 %v1580
          %1648 = vmatprep.subr.bf16.mxu0 0
          %1649 = vmatpush1.bf16.msra.mxu0 %v1581
          %1650 = vmatprep.subr.bf16.mxu0 0
          %1651 = vmatpush1.bf16.msra.mxu0 %v1582
          %1652 = vmatprep.subr.bf16.mxu0 0
          %1653 = vmatpush1.bf16.msra.mxu0 %v1583
          %1654 = vmatprep.subr.bf16.mxu0 0
          %1655 = vmatpush1.bf16.msra.mxu0 %v1584
          %1656 = vmatprep.subr.bf16.mxu0 0
          %1657 = vmatpush1.bf16.msra.mxu0 %v1585
          %1658 = vmatprep.subr.bf16.mxu0 0
          %1659 = vmatpush1.bf16.msra.mxu0 %v1586
          %1660 = vmatprep.subr.bf16.mxu0 0
          %1661 = vmatpush1.bf16.msra.mxu0 %v1587
          %1662 = vmatprep.subr.bf16.mxu0 0
          %1663 = vmatpush1.bf16.msra.mxu0 %v1588
          %1664 = vmatprep.subr.bf16.mxu0 0
          %1665 = vmatpush1.bf16.msra.mxu0 %v1589
          %1666 = vmatprep.subr.bf16.mxu0 0
          %1667 = vmatpush1.bf16.msra.mxu0 %v1590
          %1668 = vmatprep.subr.bf16.mxu0 0
          %1669 = vmatpush1.bf16.msra.mxu0 %v1591
          %1670 = vmatprep.subr.bf16.mxu0 0
          %1671 = vmatpush1.bf16.msra.mxu0 %v1592
          %1672 = vmatprep.subr.bf16.mxu0 0
          %1673 = vmatpush1.bf16.msra.mxu0 %v1593
          %1674 = vmatprep.mubr.bf16.mxu0 %v1376
          %1675 = vmatmul.mubr.bf16.gmra.mrb[0].mxu0 %v1375
          %v1676 = vpop.f32.mrb[0].mxu0
          %v1677 = vadd.f32 %v1448, %v1676
          %v1678 = vpop.f32.mrb[0].mxu0
          %v1679 = vpop.f32.mrb[0].mxu0
          %v1680 = vpop.f32.mrb[0].mxu0
          %1681 = vdwg.mxu0
          %1682 = vmatprep.subr.bf16.mxu0 0
          %1683 = vmatpush1.bf16.msra.mxu0 %v1594
          %1684 = vmatprep.subr.bf16.mxu0 0
          %1685 = vmatpush1.bf16.msra.mxu0 %v1595
          %1686 = vmatprep.subr.bf16.mxu0 0
          %1687 = vmatpush1.bf16.msra.mxu0 %v1596
          %1688 = vmatprep.subr.bf16.mxu0 0
          %1689 = vmatpush1.bf16.msra.mxu0 %v1597
          %1690 = vmatprep.subr.bf16.mxu0 0
          %1691 = vmatpush1.bf16.msra.mxu0 %v1598
          %1692 = vmatprep.subr.bf16.mxu0 0
          %1693 = vmatpush1.bf16.msra.mxu0 %v1599
          %1694 = vmatprep.subr.bf16.mxu0 0
          %1695 = vmatpush1.bf16.msra.mxu0 %v1600
          %1696 = vmatprep.subr.bf16.mxu0 0
          %1697 = vmatpush1.bf16.msra.mxu0 %v1601
          %1698 = vmatprep.subr.bf16.mxu0 0
          %1699 = vmatpush1.bf16.msra.mxu0 %v1602
          %1700 = vmatprep.subr.bf16.mxu0 0
          %1701 = vmatpush1.bf16.msra.mxu0 %v1603
          %1702 = vmatprep.subr.bf16.mxu0 0
          %1703 = vmatpush1.bf16.msra.mxu0 %v1604
          %1704 = vmatprep.subr.bf16.mxu0 0
          %1705 = vmatpush1.bf16.msra.mxu0 %v1605
          %1706 = vmatprep.subr.bf16.mxu0 0
          %1707 = vmatpush1.bf16.msra.mxu0 %v1606
          %1708 = vmatprep.subr.bf16.mxu0 0
          %1709 = vmatpush1.bf16.msra.mxu0 %v1607
          %1710 = vmatprep.subr.bf16.mxu0 0
          %1711 = vmatpush1.bf16.msra.mxu0 %v1608
          %1712 = vmatprep.subr.bf16.mxu0 0
          %1713 = vmatpush1.bf16.msra.mxu0 %v1609
          %1714 = vmatprep.mubr.bf16.mxu0 %v1378
          %1715 = vmatmul.mubr.bf16.gmra.mrb[0].mxu0 %v1377
          %v1716 = vpop.f32.mrb[0].mxu0
          %v1717 = vadd.f32 %v1677, %v1716
          %v1718 = vpop.f32.mrb[0].mxu0
          %v1719 = vpop.f32.mrb[0].mxu0
          %v1720 = vpop.f32.mrb[0].mxu0
          %1721 = vdwg.mxu0
          %v1722 = vmax.f32 %v1717, 0.0
          %v1723 = vpack.c.bf16 %v1722, %v1722
          %v1724 = vld [vmem:[%s5] sm:$0xf]
          %v1725 = vld [vmem:[%s5 + $0x4] sm:$0xf]
          %v1726 = vld [vmem:[%s5 + $0x8] sm:$0xf]
          %v1727 = vld [vmem:[%s5 + $0xc] sm:$0xf]
          %v1728 = vld [vmem:[%s5 + $0x10] sm:$0xf]
          %v1729 = vld [vmem:[%s5 + $0x14] sm:$0xf]
          %v1730 = vld [vmem:[%s5 + $0x18] sm:$0xf]
          %v1731 = vld [vmem:[%s5 + $0x1c] sm:$0xf]
          %v1732 = vld [vmem:[%s5 + $0x20] sm:$0xf]
          %v1733 = vld [vmem:[%s5 + $0x24] sm:$0xf]
          %v1734 = vld [vmem:[%s5 + $0x28] sm:$0xf]
          %v1735 = vld [vmem:[%s5 + $0x2c] sm:$0xf]
          %v1736 = vld [vmem:[%s5 + $0x30] sm:$0xf]
          %v1737 = vld [vmem:[%s5 + $0x34] sm:$0xf]
          %v1738 = vld [vmem:[%s5 + $0x38] sm:$0xf]
          %v1739 = vld [vmem:[%s5 + $0x3c] sm:$0xf]
          %v1740 = vld [vmem:[%s6] sm:$0x1]
          %v1742 = vlaneseq
          %v1743 = vshrl.u32 %v1742, 7
          %v1744 = vsub.s32 0, %v1743
          %v1745 = vrot.slane %v1740, %v1744
          %v1763 = vunpack.c.l.b16 %v1724
          %v1764 = vunpack.c.l.b16 %v1725
          %v1765 = vunpack.c.l.b16 %v1726
          %v1766 = vunpack.c.l.b16 %v1727
          %v1767 = vunpack.c.l.b16 %v1728
          %v1768 = vunpack.c.l.b16 %v1729
          %v1769 = vunpack.c.l.b16 %v1730
          %v1770 = vunpack.c.l.b16 %v1731
          %v1771 = vunpack.c.l.b16 %v1732
          %v1772 = vunpack.c.l.b16 %v1733
          %v1773 = vunpack.c.l.b16 %v1734
          %v1774 = vunpack.c.l.b16 %v1735
          %v1775 = vunpack.c.l.b16 %v1736
          %v1776 = vunpack.c.l.b16 %v1737
          %v1777 = vunpack.c.l.b16 %v1738
          %v1778 = vunpack.c.l.b16 %v1739
          %v1779 = vpack.c.b16 %v1764, %v1763
          %v1780 = vpack.c.b16 %v1766, %v1765
          %v1781 = vpack.c.b16 %v1768, %v1767
          %v1782 = vpack.c.b16 %v1770, %v1769
          %v1783 = vpack.c.b16 %v1772, %v1771
          %v1784 = vpack.c.b16 %v1774, %v1773
          %v1785 = vpack.c.b16 %v1776, %v1775
          %v1786 = vpack.c.b16 %v1778, %v1777
          %1795 = vmatprep.subr.bf16.mxu0 0
          %1796 = vmatpush1.bf16.msra.mxu0 %v1779
          %1797 = vmatprep.subr.bf16.mxu0 0
          %1798 = vmatpush1.bf16.msra.mxu0 %v1780
          %1799 = vmatprep.subr.bf16.mxu0 0
          %1800 = vmatpush1.bf16.msra.mxu0 %v1781
          %1801 = vmatprep.subr.bf16.mxu0 0
          %1802 = vmatpush1.bf16.msra.mxu0 %v1782
          %1803 = vmatprep.subr.bf16.mxu0 0
          %1804 = vmatpush1.bf16.msra.mxu0 %v1783
          %1805 = vmatprep.subr.bf16.mxu0 0
          %1806 = vmatpush1.bf16.msra.mxu0 %v1784
          %1807 = vmatprep.subr.bf16.mxu0 0
          %1808 = vmatpush1.bf16.msra.mxu0 %v1785
          %1809 = vmatprep.subr.bf16.mxu0 0
          %1810 = vmatpush1.bf16.msra.mxu0 %v1786
          %1811 = vmatprep.subr.bf16.mxu0 0
          %1812 = vmatpush1.bf16.msra.mxu0 0
          %1813 = vmatprep.subr.bf16.mxu0 0
          %1814 = vmatpush1.bf16.msra.mxu0 0
          %1815 = vmatprep.subr.bf16.mxu0 0
          %1816 = vmatpush1.bf16.msra.mxu0 0
          %1817 = vmatprep.subr.bf16.mxu0 0
          %1818 = vmatpush1.bf16.msra.mxu0 0
          %1819 = vmatprep.subr.bf16.mxu0 0
          %1820 = vmatpush1.bf16.msra.mxu0 0
          %1821 = vmatprep.subr.bf16.mxu0 0
          %1822 = vmatpush1.bf16.msra.mxu0 0
          %1823 = vmatprep.subr.bf16.mxu0 0
          %1824 = vmatpush1.bf16.msra.mxu0 0
          %1825 = vmatprep.subr.bf16.mxu0 0
          %1826 = vmatpush1.bf16.msra.mxu0 0
          %1827 = vmatprep.mubr.bf16.mxu0 0
          %1828 = vmatmul.mubr.bf16.gmra.mrb[0].mxu0 %v1723
          %v1829 = vpop.f32.mrb[0].mxu0
          %v1830 = vadd.f32 %v1745, %v1829
          %v1831 = vpop.f32.mrb[0].mxu0
          %v1832 = vpop.f32.mrb[0].mxu0
          %v1833 = vpop.f32.mrb[0].mxu0
          %1834 = vdwg.mxu0
          %v1835 = vpack.c.bf16 %v1830, %v1830
          %v1836 = vld [vmem:[%s7] sm:$0xff]
          %v1837 = vld [vmem:[%s7 + $0x8] sm:$0xf]
          %v1838 = vld [vmem:[%s7 + $0xc] sm:$0xff]
          %v1839 = vld [vmem:[%s7 + $0x14] sm:$0xf]
          %v1840 = vld [vmem:[%s7 + $0x18] sm:$0xff]
          %v1841 = vld [vmem:[%s7 + $0x20] sm:$0xf]
          %v1842 = vld [vmem:[%s7 + $0x24] sm:$0xff]
          %v1843 = vld [vmem:[%s7 + $0x2c] sm:$0xf]
          %v1844 = vld [vmem:[%s7 + $0x30] sm:$0xff]
          %v1845 = vld [vmem:[%s7 + $0x38] sm:$0xf]
          %v1846 = vld [vmem:[%s7 + $0x3c] sm:$0xff]
          %v1847 = vld [vmem:[%s7 + $0x44] sm:$0xf]
          %v1848 = vld [vmem:[%s7 + $0x48] sm:$0xff]
          %v1849 = vld [vmem:[%s7 + $0x50] sm:$0xf]
          %v1850 = vld [vmem:[%s7 + $0x54] sm:$0xff]
          %v1851 = vld [vmem:[%s7 + $0x5c] sm:$0xf]
          %v1852 = vld [vmem:[%s7 + $0x60] sm:$0xff]
          %v1853 = vld [vmem:[%s7 + $0x68] sm:$0xf]
          %v1854 = vld [vmem:[%s7 + $0x6c] sm:$0xff]
          %v1855 = vld [vmem:[%s7 + $0x74] sm:$0xf]
          %v1856 = vld [vmem:[%s7 + $0x78] sm:$0xff]
          %v1857 = vld [vmem:[%s7 + $0x80] sm:$0xf]
          %v1858 = vld [vmem:[%s7 + $0x84] sm:$0xff]
          %v1859 = vld [vmem:[%s7 + $0x8c] sm:$0xf]
          %v1860 = vld [vmem:[%s7 + $0x90] sm:$0xff]
          %v1861 = vld [vmem:[%s7 + $0x98] sm:$0xf]
          %v1862 = vld [vmem:[%s7 + $0x9c] sm:$0xff]
          %v1863 = vld [vmem:[%s7 + $0xa4] sm:$0xf]
          %v1864 = vld [vmem:[%s7 + $0xa8] sm:$0xff]
          %v1865 = vld [vmem:[%s7 + $0xb0] sm:$0xf]
          %v1866 = vld [vmem:[%s7 + $0xb4] sm:$0xff]
          %v1867 = vld [vmem:[%s7 + $0xbc] sm:$0xf]
          %v1868 = vld [vmem:[%s8] sm:$0x7]
          %v1870 = vlaneseq
          %v1871 = vshrl.u32 %v1870, 7
          %v1872 = vsub.s32 0, %v1871
          %v1873 = vrot.slane %v1868, %v1872
          %v1874 = vlaneseq
          %v1875 = vshrl.u32 %v1874, 7
          %v1876 = vsub.s32 1, %v1875
          %v1877 = vrot.slane %v1868, %v1876
          %v1878 = vlaneseq
          %v1879 = vshrl.u32 %v1878, 7
          %v1880 = vsub.s32 2, %v1879
          %v1881 = vrot.slane %v1868, %v1880
          %v1917 = vunpack.c.l.b16 %v1836
          %v1918 = vunpack.c.h.b16 %v1836
          %v1919 = vunpack.c.l.b16 %v1837
          %v1920 = vunpack.c.l.b16 %v1838
          %v1921 = vunpack.c.h.b16 %v1838
          %v1922 = vunpack.c.l.b16 %v1839
          %v1923 = vunpack.c.l.b16 %v1840
          %v1924 = vunpack.c.h.b16 %v1840
          %v1925 = vunpack.c.l.b16 %v1841
          %v1926 = vunpack.c.l.b16 %v1842
          %v1927 = vunpack.c.h.b16 %v1842
          %v1928 = vunpack.c.l.b16 %v1843
          %v1929 = vunpack.c.l.b16 %v1844
          %v1930 = vunpack.c.h.b16 %v1844
          %v1931 = vunpack.c.l.b16 %v1845
          %v1932 = vunpack.c.l.b16 %v1846
          %v1933 = vunpack.c.h.b16 %v1846
          %v1934 = vunpack.c.l.b16 %v1847
          %v1935 = vunpack.c.l.b16 %v1848
          %v1936 = vunpack.c.h.b16 %v1848
          %v1937 = vunpack.c.l.b16 %v1849
          %v1938 = vunpack.c.l.b16 %v1850
          %v1939 = vunpack.c.h.b16 %v1850
          %v1940 = vunpack.c.l.b16 %v1851
          %v1941 = vunpack.c.l.b16 %v1852
          %v1942 = vunpack.c.h.b16 %v1852
          %v1943 = vunpack.c.l.b16 %v1853
          %v1944 = vunpack.c.l.b16 %v1854
          %v1945 = vunpack.c.h.b16 %v1854
          %v1946 = vunpack.c.l.b16 %v1855
          %v1947 = vunpack.c.l.b16 %v1856
          %v1948 = vunpack.c.h.b16 %v1856
          %v1949 = vunpack.c.l.b16 %v1857
          %v1950 = vunpack.c.l.b16 %v1858
          %v1951 = vunpack.c.h.b16 %v1858
          %v1952 = vunpack.c.l.b16 %v1859
          %v1953 = vunpack.c.l.b16 %v1860
          %v1954 = vunpack.c.h.b16 %v1860
          %v1955 = vunpack.c.l.b16 %v1861
          %v1956 = vunpack.c.l.b16 %v1862
          %v1957 = vunpack.c.h.b16 %v1862
          %v1958 = vunpack.c.l.b16 %v1863
          %v1959 = vunpack.c.l.b16 %v1864
          %v1960 = vunpack.c.h.b16 %v1864
          %v1961 = vunpack.c.l.b16 %v1865
          %v1962 = vunpack.c.l.b16 %v1866
          %v1963 = vunpack.c.h.b16 %v1866
          %v1964 = vunpack.c.l.b16 %v1867
          %v1965 = vpack.c.b16 %v1920, %v1917
          %v1966 = vpack.c.b16 %v1921, %v1918
          %v1967 = vpack.c.b16 %v1922, %v1919
          %v1968 = vpack.c.b16 %v1926, %v1923
          %v1969 = vpack.c.b16 %v1927, %v1924
          %v1970 = vpack.c.b16 %v1928, %v1925
          %v1971 = vpack.c.b16 %v1932, %v1929
          %v1972 = vpack.c.b16 %v1933, %v1930
          %v1973 = vpack.c.b16 %v1934, %v1931
          %v1974 = vpack.c.b16 %v1938, %v1935
          %v1975 = vpack.c.b16 %v1939, %v1936
          %v1976 = vpack.c.b16 %v1940, %v1937
          %v1977 = vpack.c.b16 %v1944, %v1941
          %v1978 = vpack.c.b16 %v1945, %v1942
          %v1979 = vpack.c.b16 %v1946, %v1943
          %v1980 = vpack.c.b16 %v1950, %v1947
          %v1981 = vpack.c.b16 %v1951, %v1948
          %v1982 = vpack.c.b16 %v1952, %v1949
          %v1983 = vpack.c.b16 %v1956, %v1953
          %v1984 = vpack.c.b16 %v1957, %v1954
          %v1985 = vpack.c.b16 %v1958, %v1955
          %v1986 = vpack.c.b16 %v1962, %v1959
          %v1987 = vpack.c.b16 %v1963, %v1960
          %v1988 = vpack.c.b16 %v1964, %v1961
          %2013 = vmatprep.subr.bf16.mxu0 %v1966
          %2014 = vmatpush1.bf16.msra.mxu0 %v1965
          %2015 = vmatprep.subr.bf16.mxu0 %v1969
          %2016 = vmatpush1.bf16.msra.mxu0 %v1968
          %2017 = vmatprep.subr.bf16.mxu0 %v1972
          %2018 = vmatpush1.bf16.msra.mxu0 %v1971
          %2019 = vmatprep.subr.bf16.mxu0 %v1975
          %2020 = vmatpush1.bf16.msra.mxu0 %v1974
          %2021 = vmatprep.subr.bf16.mxu0 %v1978
          %2022 = vmatpush1.bf16.msra.mxu0 %v1977
          %2023 = vmatprep.subr.bf16.mxu0 %v1981
          %2024 = vmatpush1.bf16.msra.mxu0 %v1980
          %2025 = vmatprep.subr.bf16.mxu0 %v1984
          %2026 = vmatpush1.bf16.msra.mxu0 %v1983
          %2027 = vmatprep.subr.bf16.mxu0 %v1987
          %2028 = vmatpush1.bf16.msra.mxu0 %v1986
          %2029 = vmatprep.subr.bf16.mxu0 0
          %2030 = vmatpush1.bf16.msra.mxu0 0
          %2031 = vmatprep.subr.bf16.mxu0 0
          %2032 = vmatpush1.bf16.msra.mxu0 0
          %2033 = vmatprep.subr.bf16.mxu0 0
          %2034 = vmatpush1.bf16.msra.mxu0 0
          %2035 = vmatprep.subr.bf16.mxu0 0
          %2036 = vmatpush1.bf16.msra.mxu0 0
          %2037 = vmatprep.subr.bf16.mxu0 0
          %2038 = vmatpush1.bf16.msra.mxu0 0
          %2039 = vmatprep.subr.bf16.mxu0 0
          %2040 = vmatpush1.bf16.msra.mxu0 0
          %2041 = vmatprep.subr.bf16.mxu0 0
          %2042 = vmatpush1.bf16.msra.mxu0 0
          %2043 = vmatprep.subr.bf16.mxu0 0
          %2044 = vmatpush1.bf16.msra.mxu0 0
          %2045 = vmatprep.mubr.bf16.mxu0 0
          %2046 = vmatmul.mubr.bf16.gmra.mrb[0].mxu0 %v1835
          %v2047 = vpop.f32.mrb[0].mxu0
          %v2048 = vadd.f32 %v1873, %v2047
          %v2049 = vpop.f32.mrb[0].mxu0
          %v2050 = vadd.f32 %v1877, %v2049
          %v2051 = vpop.f32.mrb[0].mxu0
          %v2052 = vpop.f32.mrb[0].mxu0
          %2053 = vdwg.mxu0
          %2054 = vmatprep.subr.bf16.mxu0 0
          %2055 = vmatpush1.bf16.msra.mxu0 %v1967
          %2056 = vmatprep.subr.bf16.mxu0 0
          %2057 = vmatpush1.bf16.msra.mxu0 %v1970
          %2058 = vmatprep.subr.bf16.mxu0 0
          %2059 = vmatpush1.bf16.msra.mxu0 %v1973
          %2060 = vmatprep.subr.bf16.mxu0 0
          %2061 = vmatpush1.bf16.msra.mxu0 %v1976
          %2062 = vmatprep.subr.bf16.mxu0 0
          %2063 = vmatpush1.bf16.msra.mxu0 %v1979
          %2064 = vmatprep.subr.bf16.mxu0 0
          %2065 = vmatpush1.bf16.msra.mxu0 %v1982
          %2066 = vmatprep.subr.bf16.mxu0 0
          %2067 = vmatpush1.bf16.msra.mxu0 %v1985
          %2068 = vmatprep.subr.bf16.mxu0 0
          %2069 = vmatpush1.bf16.msra.mxu0 %v1988
          %2070 = vmatprep.subr.bf16.mxu0 0
          %2071 = vmatpush1.bf16.msra.mxu0 0
          %2072 = vmatprep.subr.bf16.mxu0 0
          %2073 = vmatpush1.bf16.msra.mxu0 0
          %2074 = vmatprep.subr.bf16.mxu0 0
          %2075 = vmatpush1.bf16.msra.mxu0 0
          %2076 = vmatprep.subr.bf16.mxu0 0
          %2077 = vmatpush1.bf16.msra.mxu0 0
          %2078 = vmatprep.subr.bf16.mxu0 0
          %2079 = vmatpush1.bf16.msra.mxu0 0
          %2080 = vmatprep.subr.bf16.mxu0 0
          %2081 = vmatpush1.bf16.msra.mxu0 0
          %2082 = vmatprep.subr.bf16.mxu0 0
          %2083 = vmatpush1.bf16.msra.mxu0 0
          %2084 = vmatprep.subr.bf16.mxu0 0
          %2085 = vmatpush1.bf16.msra.mxu0 0
          %2086 = vmatprep.mubr.bf16.mxu0 0
          %2087 = vmatmul.mubr.bf16.gmra.mrb[0].mxu0 %v1835
          %v2088 = vpop.f32.mrb[0].mxu0
          %v2089 = vadd.f32 %v1881, %v2088
          %v2090 = vpop.f32.mrb[0].mxu0
          %v2091 = vpop.f32.mrb[0].mxu0
          %v2092 = vpop.f32.mrb[0].mxu0
          %2093 = vdwg.mxu0
          %2094 = vst [vmem:[#allocation3] sm:$0xff] %v1830
          %2095 = vst [vmem:[#allocation5] sm:$0xff] %v2048
          %2096 = vst [vmem:[#allocation5 + $0x8] sm:$0xff] %v2050
          %2097 = vst [vmem:[#allocation5 + $0x10] sm:$0xff] %v2089
        $region64: #{_forward.1} parent=55 // pred_fallthru
          _
        // Predicated region
        $region65: #{_forward.1} parent=55 // pred_check
          %p2098 = pneg %p236
        $region66: #{_forward.1} parent=55 // pred_check_branch
          %2100 = sbr.rel (%p2098) target = $region68
        $region67: #{_forward.1} parent=55 // pred_region
          %s2102 = ssub.s32 128, 128
          %2103 = vsyncadd [#allocation4], %s2102
          %s2105 = sshll.u32 [#allocation3], 4
          %s2106 = int_to_ptr.vmem [resolvable:$true] %s2105
          %2108 = dma.vmem_to_hbm [thread:$0]  %s2106, 128, %s9, [#allocation4]
        $region68: #{_forward.1} parent=55 // pred_fallthru
          _
        // Predicated region
        $region69: #{_forward.1} parent=55 // pred_check
          %p2109 = pneg %p257
        $region70: #{_forward.1} parent=55 // pred_check_branch
          %2111 = sbr.rel (%p2109) target = $region72
        $region71: #{_forward.1} parent=55 // pred_region
          %s2113 = ssub.s32 384, 384
          %2114 = vsyncadd [#allocation6], %s2113
          %s2116 = sshll.u32 [#allocation5], 4
          %s2117 = int_to_ptr.vmem [resolvable:$true] %s2116
          %2119 = dma.vmem_to_hbm [thread:$0]  %s2117, 384, %s10, [#allocation6]
        $region72: #{_forward.1} parent=55 // pred_fallthru
          _
        // Predicated region
        $region73: #{_forward.1} parent=55 // pred_check
          %p2120 = pneg %p236
        $region74: #{_forward.1} parent=55 // pred_check_branch
          %2122 = sbr.rel (%p2120) target = $region76
        $region75: #{_forward.1} parent=55 // pred_region
          %2123 = dma.done [#allocation4], 128
        $region76: #{_forward.1} parent=55 // pred_fallthru
          _
        // Predicated region
        $region77: #{_forward.1} parent=55 // pred_check
          %p2124 = pneg %p257
        $region78: #{_forward.1} parent=55 // pred_check_branch
          %2126 = sbr.rel (%p2124) target = $region80
        $region79: #{_forward.1} parent=55 // pred_region
          %2127 = dma.done [#allocation6], 384
        $region80: #{_forward.1} parent=55 // pred_fallthru
          _
      $region56: #{_forward.1} parent=5 // pred_fallthru
        _
      %p2128 = scmp.le.s32.totalorder 2, %s19
      // Predicated region
      $region81: #{_forward.1} parent=5 // pred_check
        %p2129 = pneg %p2128
      $region82: #{_forward.1} parent=5 // pred_check_branch
        %2131 = sbr.rel (%p2129) target = $region84
      $region83: #{_forward.1} parent=5 // pred_region
        %s2132 = ssub.s32 %s19, 2
      $region84: #{_forward.1} parent=5 // pred_fallthru
        _
    $region6: #{_forward.1} parent=1 // loop_footer
      %s23 = sadd.s32 1, %s19
    $region7: #{_forward.1} parent=1 // loop_footer_branch
      %18 = sbr.rel target = $region3
    $region8: #{_forward.1} parent=1 // loop_exit
      _
    %2133 = vsyncpa [#allocation4], 1
    %s2134 = scalar_lea.sflag [#allocation4], 1
    %2135 = vsyncpa %s2134, 1
    %2136 = vsyncpa [#allocation6], 1

</llo_original>
